<compile_context>
chip_gen: v5e
topology: v5e:2x2
jax: 0.10.0
libtpu: 0.0.40
codegen_flags: <defaults>
</compile_context>

<pallas_src>
import functools
import math

import jax
import jax.numpy as jnp
from jax.experimental import pallas as pl
from jax.experimental.pallas import tpu as pltpu

LN_EPS = 1e-5  # PyTorch nn.LayerNorm default


def _round_up(x, m):
    return ((x + m - 1) // m) * m


def _layernorm(y, gamma, beta):
    mean = jnp.mean(y, axis=-1, keepdims=True)
    var = jnp.mean((y - mean) ** 2, axis=-1, keepdims=True)
    return (y - mean) * jax.lax.rsqrt(var + LN_EPS) * gamma + beta


# ----------------------------------------------------------------------------
# Kernel
# ----------------------------------------------------------------------------
def encoder_stack_kernel(k_in_ref, v_in_ref, q_in_ref, wqkv_ref, bqkv_ref,
                         wo_ref, w1_ref, b1_ref, w2_ref, vecs_ref,
                         out_ref, attw_ref, *, use_bf16_exp):
    """One grid step = one batch tile x one transformer block.

    grid = (num_batch_tiles, num_blocks).  The block axis is the inner,
    sequential ("arbitrary") axis; out_ref's block index is invariant along
    it, so the activations stay resident in VMEM across blocks of a batch tile
    and out_ref is used as the carry buffer.
    """
    blk = pl.program_id(1)
    f32 = jnp.float32
    bf16 = jnp.bfloat16

    # torch.cat((K, V, Q), dim=2), written directly into the VMEM-resident
    # carry -- no wrapper-level concatenate / extra HBM round trip.
    @pl.when(blk == 0)
    def _():
        out_ref[...] = jnp.concatenate(
            [k_in_ref[...].astype(f32),
             v_in_ref[...].astype(f32),
             q_in_ref[...].astype(f32)], axis=-1)

    Bt, S, D = out_ref.shape
    Hp = wo_ref.shape[0]          # lane-padded hidden size (multiple of 128)
    Sp = attw_ref.shape[-1]       # (possibly) lane-padded attention-weight dim
    R = Bt * S

    vecs = vecs_ref[...]                       # (6, D) f32 packed small vectors
    bo, b2 = vecs[0:1], vecs[1:2]
    g1, be1 = vecs[2:3], vecs[3:4]
    g2, be2 = vecs[4:5], vecs[5:6]

    x2 = out_ref[...].reshape(R, D)            # carried activations (f32)

    # --- fused QKV projection (one MXU call); bf16 operands, f32 accumulation.
    # 1/sqrt(H) is pre-baked into the q columns of wqkv/bqkv.  Single bf16 cast
    # of the result; q/k/v are lane-aligned (Hp % 128 == 0) free slices.
    qkv = (jnp.dot(x2.astype(bf16), wqkv_ref[...], preferred_element_type=f32)
           + bqkv_ref[...]).astype(bf16)
    q = qkv[:, 0 * Hp:1 * Hp].reshape(Bt, S, Hp)
    k = qkv[:, 1 * Hp:2 * Hp].reshape(Bt, S, Hp)
    v = qkv[:, 2 * Hp:3 * Hp].reshape(Bt, S, Hp)

    # --- batched scaled-dot-product attention over the batch tile.
    s = jnp.einsum("bqh,bkh->bqk", q, k, preferred_element_type=f32)
    s = s - jnp.max(s, axis=-1, keepdims=True)
    if use_bf16_exp:
        # v6e/v7x: bf16 EUP exp at ~2x rate; sum/reciprocal stay f32.
        e = jnp.exp(s.astype(bf16))
        inv = pl.reciprocal(jnp.sum(e.astype(f32), axis=-1, keepdims=True),
                            approx=True)
        w16 = e * inv.astype(bf16)                      # bf16 attention weights
    else:
        e = jnp.exp(s)
        inv = pl.reciprocal(jnp.sum(e, axis=-1, keepdims=True), approx=True)
        w16 = (e * inv).astype(bf16)

    # Lane-dense writeback (pad last dim with zeros when Sp > S so the store
    # lowers to unmasked vst for the dominant (L,B,S,S) HBM stream).
    if Sp > S:
        attw_ref[...] = jnp.concatenate(
            [w16, jnp.zeros((Bt, S, Sp - S), bf16)], axis=-1)
    else:
        attw_ref[...] = w16

    ctx = jnp.einsum("bqk,bkh->bqh", w16, v, preferred_element_type=f32)
    attn_out = jnp.dot(ctx.reshape(R, Hp).astype(bf16), wo_ref[...],
                       preferred_element_type=f32) + bo

    # --- residual + LayerNorm 1.
    res = _layernorm(x2 + attn_out, g1, be1)

    # --- feed-forward: Linear -> ReLU -> Linear
    h = jnp.maximum(jnp.dot(res.astype(bf16), w1_ref[...],
                            preferred_element_type=f32) + b1_ref[...], 0.0)
    ff = jnp.dot(h.astype(bf16), w2_ref[...], preferred_element_type=f32) + b2

    # --- residual + LayerNorm 2; keep the result resident for the next block.
    out_ref[...] = _layernorm(res + ff, g2, be2).reshape(Bt, S, D)


# ----------------------------------------------------------------------------
# Generation-aware tiling
# ----------------------------------------------------------------------------
def _device_profile():
    """VMEM budget / core count / bf16-EUP support keyed off the device kind."""
    kind = ""
    try:
        kind = jax.devices()[0].device_kind.lower()
    except Exception:
        pass
    if "v7" in kind:
        # v7x: 64 MiB VMEM per TensorCore, 2 TCs per chip, bf16 EUP.
        return dict(vmem_bytes=64 * 2**20, cores=2, bf16_eup=True)
    if "v6" in kind:
        return dict(vmem_bytes=128 * 2**20, cores=1, bf16_eup=True)
    if "v4" in kind or "v5p" in kind:
        return dict(vmem_bytes=128 * 2**20, cores=2, bf16_eup=False)
    if "v2" in kind or "v3" in kind:
        return dict(vmem_bytes=16 * 2**20, cores=2, bf16_eup=False)
    # v5e / unknown.
    return dict(vmem_bytes=128 * 2**20, cores=1, bf16_eup=False)


def _vmem_bytes_estimate(Bt, S, D, Hp, F, Sp):
    """Rough per-grid-step VMEM footprint (double-buffered I/O + intermediates)."""
    R = Bt * S
    f4, b2b = 4, 2
    act_in = 2 * Bt * S * D * f4                       # K/V/Q input tiles
    carry = 2 * Bt * S * D * f4                        # resident activation carry
    attw = 2 * Bt * S * Sp * b2b                       # bf16 attention weights out
    weights = 2 * b2b * (D * 3 * Hp + Hp * D + D * F + F * D)
    biases = 2 * f4 * (3 * Hp + F + 6 * D)
    interm = (R * 3 * Hp * (f4 + b2b)                  # qkv f32 + bf16
              + Bt * S * Sp * (2 * f4 + 2 * b2b)       # scores / exp / weights
              + R * Hp * f4                            # ctx
              + R * F * (f4 + b2b)                     # ffn hidden
              + 3 * R * D * f4)                        # residual / LN temps
    return act_in + carry + attw + weights + biases + interm


def _pick_batch_tile(B, S, D, Hp, F, Sp, prof):
    """Largest batch tile whose estimated VMEM fits the generation budget.

    More rows per step => more MXU work per re-streamed weight byte (the
    block-axis loop re-fetches every block's weights once per batch tile).
    On multi-TensorCore chips, prefer exactly one tile per core.
    """
    budget = int(prof["vmem_bytes"] * 0.70)
    divisors = [d for d in range(B, 0, -1) if B % d == 0]
    fit = [bt for bt in divisors
           if _vmem_bytes_estimate(bt, S, D, Hp, F, Sp) <= budget]
    if not fit:
        return 1
    # Prefer tiles whose flattened row count stays sublane-aligned (free reshape).
    aligned = [bt for bt in fit if (bt * S) % 8 == 0]
    pool = aligned or fit
    if prof["cores"] > 1:
        for bt in pool:
            if B // bt >= prof["cores"]:
                return bt
    return pool[0]


def _attw_padded_len(S):
    """Lane-dense attention-weight last dim: pad to 128 only when cheap."""
    if S % 128 == 0:
        return S
    Sp = _round_up(S, 128)
    # For small S the padded HBM stream would cost more than the masked-store
    # penalty it removes; only pad when the byte overhead is <= 25%.
    return Sp if Sp <= int(S * 1.25) else S


# ----------------------------------------------------------------------------
# Wrapper
# ----------------------------------------------------------------------------
def encoder_transformer(K, V, Q, packed, *, batch_tile=None):
    """EncoderTransformer.forward: all transformer blocks in one pallas_call.

    Returns (X_out, [attention_weights per block]); weights are bfloat16.
    """
    B, S, Dk = K.shape
    Dv, Dq = V.shape[2], Q.shape[2]
    D = Dk + Dv + Dq
    L, _, threeHp = packed["wqkv"].shape
    Hp = threeHp // 3
    F = packed["w1"].shape[2]
    H = int(packed["hidden_size"])

    prof = _device_profile()
    Sp = _attw_padded_len(S)
    Bt = batch_tile if batch_tile is not None else _pick_batch_tile(
        B, S, D, Hp, F, Sp, prof)
    assert B % Bt == 0
    grid = (B // Bt, L)

    use_bf16_exp = bool(prof["bf16_eup"] and H < 256)
    kernel = functools.partial(encoder_stack_kernel, use_bf16_exp=use_bf16_exp)

    est = _vmem_bytes_estimate(Bt, S, D, Hp, F, Sp)
    vmem_limit = int(min(prof["vmem_bytes"] * 0.9, max(32 * 2**20, 2 * est)))

    def per_block(shape):
        # Per-block parameter stacked along a leading (squeezed) block axis.
        return pl.BlockSpec((None,) + shape,
                            lambda bi, li, s=shape: (li,) + (0,) * len(s))

    def batch_tile_spec(d):
        # Block index invariant along the block axis -> fetched once per tile.
        return pl.BlockSpec((Bt, S, d), lambda bi, li: (bi, 0, 0))

    y, attw = pl.pallas_call(
        kernel,
        out_shape=(jax.ShapeDtypeStruct((B, S, D), jnp.float32),
                   jax.ShapeDtypeStruct((L, B, S, Sp), jnp.bfloat16)),
        grid=grid,
        in_specs=[
            batch_tile_spec(Dk),                                    # K tile
            batch_tile_spec(Dv),                                    # V tile
            batch_tile_spec(Dq),                                    # Q tile
            per_block((D, 3 * Hp)),                                 # fused Wqkv (bf16)
            per_block((1, 3 * Hp)),                                 # fused bqkv (f32)
            per_block((Hp, D)),                                     # Wo (bf16)
            per_block((D, F)),                                      # FFN W1 (bf16)
            per_block((1, F)),                                      # FFN b1 (f32)
            per_block((F, D)),                                      # FFN W2 (bf16)
            per_block((6, D)),                                      # packed bo,b2,LN params
        ],
        out_specs=(
            # Invariant along the block axis -> VMEM-resident carry.
            pl.BlockSpec((Bt, S, D), lambda bi, li: (bi, 0, 0)),
            pl.BlockSpec((None, Bt, S, Sp), lambda bi, li: (li, bi, 0, 0)),
        ),
        compiler_params=pltpu.CompilerParams(
            dimension_semantics=("parallel", "arbitrary"),
            vmem_limit_bytes=vmem_limit,
        ),
    )(K, V, Q, packed["wqkv"], packed["bqkv"], packed["wo"], packed["w1"],
      packed["b1"], packed["w2"], packed["vecs"])

    if Sp != S:
        return y, [attw[i, :, :, :S] for i in range(L)]
    return y, [attw[i] for i in range(L)]


# ----------------------------------------------------------------------------
# Parameters
# ----------------------------------------------------------------------------
def init_block_params(key, input_size, hidden_size, dim_feedforward):
    """PyTorch-style (uniform fan-in) init, weights stored as (in, out)."""
    D, H, F = input_size, hidden_size, dim_feedforward
    ks = jax.random.split(key, 8)

    def lin(k, fan_in, fan_out):
        bound = 1.0 / math.sqrt(fan_in)
        kw, kb = jax.random.split(k)
        w = jax.random.uniform(kw, (fan_in, fan_out), jnp.float32, -bound, bound)
        b = jax.random.uniform(kb, (1, fan_out), jnp.float32, -bound, bound)
        return w, b

    wq, bq = lin(ks[0], D, H)
    wk, bk = lin(ks[1], D, H)
    wv, bv = lin(ks[2], D, H)
    wo, bo = lin(ks[3], H, D)
    w1, b1 = lin(ks[4], D, F)
    w2, b2 = lin(ks[5], F, D)
    return dict(
        wq=wq, bq=bq, wk=wk, bk=bk, wv=wv, bv=bv, wo=wo, bo=bo,
        g1=jnp.ones((1, D), jnp.float32), be1=jnp.zeros((1, D), jnp.float32),
        w1=w1, b1=b1, w2=w2, b2=b2,
        g2=jnp.ones((1, D), jnp.float32), be2=jnp.zeros((1, D), jnp.float32),
    )


def pack_params(blocks):
    """Stack per-block params on a leading axis, fuse QKV (hidden padded to a
    multiple of 128 lanes so q|k|v slices are lane-aligned; padding is exact
    zeros so results are unchanged), bake 1/sqrt(H) into the q columns, pack
    small vectors, cast weights to bf16."""
    H = blocks[0]["wq"].shape[1]
    Hp = _round_up(H, 128)
    padH = Hp - H
    # NOTE: baking 1/sqrt(H) into the bf16 q weights/bias costs <= ~1 extra ulp.
    scale = 1.0 / math.sqrt(H)

    def stack(f):
        return jnp.stack([f(p) for p in blocks], axis=0)

    def pw(w):  # (D, H) -> (D, Hp)
        return jnp.pad(w, ((0, 0), (0, padH)))

    def pb(b):  # (1, H) -> (1, Hp)
        return jnp.pad(b, ((0, 0), (0, padH)))

    wqkv = stack(lambda p: jnp.concatenate(
        [pw(p["wq"] * scale), pw(p["wk"]), pw(p["wv"])],
        axis=1)).astype(jnp.bfloat16)                                 # (L,D,3Hp)
    bqkv = stack(lambda p: jnp.concatenate(
        [pb(p["bq"] * scale), pb(p["bk"]), pb(p["bv"])], axis=1))     # (L,1,3Hp) f32
    wo = stack(lambda p: jnp.pad(p["wo"],
                                 ((0, padH), (0, 0)))).astype(jnp.bfloat16)  # (L,Hp,D)
    w1 = stack(lambda p: p["w1"]).astype(jnp.bfloat16)                # (L,D,F)
    b1 = stack(lambda p: p["b1"])                                     # (L,1,F) f32
    w2 = stack(lambda p: p["w2"]).astype(jnp.bfloat16)                # (L,F,D)
    vecs = stack(lambda p: jnp.concatenate(
        [p["bo"], p["b2"], p["g1"], p["be1"], p["g2"], p["be2"]], axis=0))  # (L,6,D)
    return dict(wqkv=wqkv, bqkv=bqkv, wo=wo, w1=w1, b1=b1, w2=w2, vecs=vecs,
                hidden_size=H)


# ----------------------------------------------------------------------------
# Pure-JAX reference & demo
# ----------------------------------------------------------------------------
def _reference_forward(K, V, Q, blocks):
    X = jnp.concatenate((K, V, Q), axis=2).astype(jnp.float32)
    attws = []
    for p in blocks:
        H = p["wq"].shape[1]
        q = X @ p["wq"] + p["bq"]
        k = X @ p["wk"] + p["bk"]
        v = X @ p["wv"] + p["bv"]
        s = jnp.einsum("bqh,bkh->bqk", q, k) / math.sqrt(H)
        w = jax.nn.softmax(s, axis=-1)
        attws.append(w)
        attn = jnp.einsum("bqk,bkh->bqh", w, v) @ p["wo"] + p["bo"]
        res = _layernorm(X + attn, p["g1"], p["be1"])
        h = jnp.maximum(res @ p["w1"] + p["b1"], 0.0)
        ff = h @ p["w2"] + p["b2"]
        X = _layernorm(res + ff, p["g2"], p["be2"])
    return X, attws


if __name__ == "__main__":
    # Small, deterministic config.
    B, S = 2, 8
    input_k = input_q = input_v = 8
    input_size = input_k + input_q + input_v      # 24
    hidden_size = 16
    dim_feedforward = 32
    num_blk = 2

    root = jax.random.PRNGKey(0)
    k_in, k_params = jax.random.split(root)
    kk, kv, kq = jax.random.split(k_in, 3)
    K = jax.random.normal(kk, (B, S, input_k), jnp.float32)
    V = jax.random.normal(kv, (B, S, input_v), jnp.float32)
    Q = jax.random.normal(kq, (B, S, input_q), jnp.float32)

    blocks = [init_block_params(k, input_size, hidden_size, dim_feedforward)
              for k in jax.random.split(k_params, num_blk)]
    packed = pack_params(blocks)

    out, attn_ws = encoder_transformer(K, V, Q, packed)
    out = jax.block_until_ready(out)
    for w in attn_ws:
        jax.block_until_ready(w)

    assert out.shape == (B, S, input_size)
    assert all(w.shape == (B, S, S) for w in attn_ws)

    # Loose numerical check vs the f32 reference (kernel uses bf16 matmul
    # operands with f32 accumulation, an approx softmax reciprocal, and
    # possibly bf16 exp on v6e/v7x).
    ref_out, ref_ws = _reference_forward(K, V, Q, blocks)
    assert jnp.allclose(out, ref_out, atol=0.1, rtol=0.1), \
        float(jnp.max(jnp.abs(out - ref_out)))
    assert jnp.allclose(attn_ws[0].astype(jnp.float32), ref_ws[0], atol=0.05), \
        float(jnp.max(jnp.abs(attn_ws[0].astype(jnp.float32) - ref_ws[0])))

    print("KERNEL_OK")
</pallas_src>

<mosaic_0001>
module attributes {stable_mosaic.version = 11 : i64} {
  func.func @encoder_stack_kernel(%arg0: i32, %arg1: i32, %arg2: memref<2x8x8xf32, #tpu.memory_space<vmem>>, %arg3: memref<2x8x8xf32, #tpu.memory_space<vmem>>, %arg4: memref<2x8x8xf32, #tpu.memory_space<vmem>>, %arg5: memref<1x24x384xbf16, #tpu.memory_space<vmem>>, %arg6: memref<1x1x384xf32, #tpu.memory_space<vmem>>, %arg7: memref<1x128x24xbf16, #tpu.memory_space<vmem>>, %arg8: memref<1x24x32xbf16, #tpu.memory_space<vmem>>, %arg9: memref<1x1x32xf32, #tpu.memory_space<vmem>>, %arg10: memref<1x32x24xbf16, #tpu.memory_space<vmem>>, %arg11: memref<1x6x24xf32, #tpu.memory_space<vmem>>, %arg12: memref<2x8x24xf32, #tpu.memory_space<vmem>>, %arg13: memref<1x2x8x8xbf16, #tpu.memory_space<vmem>>) attributes {dimension_semantics = [#tpu.dimension_semantics<parallel>, #tpu.dimension_semantics<arbitrary>], iteration_bounds = array<i64: 1, 2>, scalar_prefetch = 0 : i64, scratch_operands = 0 : i64, tpu.core_type = #tpu.core_type<tc>, window_params = [{transform_indices = @transform_0, window_bounds = array<i64: 2, 8, 8>}, {transform_indices = @transform_1, window_bounds = array<i64: 2, 8, 8>}, {transform_indices = @transform_2, window_bounds = array<i64: 2, 8, 8>}, {transform_indices = @transform_3, window_bounds = array<i64: 1, 24, 384>}, {transform_indices = @transform_4, window_bounds = array<i64: 1, 1, 384>}, {transform_indices = @transform_5, window_bounds = array<i64: 1, 128, 24>}, {transform_indices = @transform_6, window_bounds = array<i64: 1, 24, 32>}, {transform_indices = @transform_7, window_bounds = array<i64: 1, 1, 32>}, {transform_indices = @transform_8, window_bounds = array<i64: 1, 32, 24>}, {transform_indices = @transform_9, window_bounds = array<i64: 1, 6, 24>}, {transform_indices = @transform_10, window_bounds = array<i64: 2, 8, 24>}, {transform_indices = @transform_11, window_bounds = array<i64: 1, 2, 8, 8>}]} {
    %c0_i32 = arith.constant 0 : i32
    %0 = arith.cmpi eq, %arg1, %c0_i32 : i32
    %1 = arith.extui %0 : i1 to i32
    %c0_i32_0 = arith.constant 0 : i32
    %2 = arith.cmpi ne, %1, %c0_i32_0 : i32
    scf.if %2 {
      %c0_49 = arith.constant 0 : index
      %c0_50 = arith.constant 0 : index
      %c0_51 = arith.constant 0 : index
      %115 = vector.load %arg2[%c0_49, %c0_50, %c0_51] : memref<2x8x8xf32, #tpu.memory_space<vmem>>, vector<2x8x8xf32>
      %c0_52 = arith.constant 0 : index
      %c0_53 = arith.constant 0 : index
      %c0_54 = arith.constant 0 : index
      %116 = vector.load %arg3[%c0_52, %c0_53, %c0_54] : memref<2x8x8xf32, #tpu.memory_space<vmem>>, vector<2x8x8xf32>
      %c0_55 = arith.constant 0 : index
      %c0_56 = arith.constant 0 : index
      %c0_57 = arith.constant 0 : index
      %117 = vector.load %arg4[%c0_55, %c0_56, %c0_57] : memref<2x8x8xf32, #tpu.memory_space<vmem>>, vector<2x8x8xf32>
      %118 = tpu.concatenate %115, %116, %117 in 2 : vector<2x8x8xf32>, vector<2x8x8xf32>, vector<2x8x8xf32> -> vector<2x8x24xf32>
      %c0_58 = arith.constant 0 : index
      %c0_59 = arith.constant 0 : index
      %c0_60 = arith.constant 0 : index
      %119 = vector.load %arg12[%c0_58, %c0_59, %c0_60] : memref<2x8x24xf32, #tpu.memory_space<vmem>>, vector<2x8x24xf32>
      tpu.vector_store %arg12[%c0_58, %c0_59, %c0_60], %118 {strides = array<i32>} : memref<2x8x24xf32, #tpu.memory_space<vmem>>, vector<2x8x24xf32>,
    } else {
    }
    %c0 = arith.constant 0 : index
    %c0_1 = arith.constant 0 : index
    %c0_2 = arith.constant 0 : index
    %3 = vector.load %arg11[%c0, %c0_1, %c0_2] : memref<1x6x24xf32, #tpu.memory_space<vmem>>, vector<1x6x24xf32>
    %4 = vector.shape_cast %3 : vector<1x6x24xf32> to vector<6x24xf32>
    %5 = vector.extract_strided_slice %4 {offsets = [0, 0], sizes = [1, 24], strides = [1, 1]} : vector<6x24xf32> to vector<1x24xf32>
    %6 = vector.extract_strided_slice %4 {offsets = [1, 0], sizes = [1, 24], strides = [1, 1]} : vector<6x24xf32> to vector<1x24xf32>
    %7 = vector.extract_strided_slice %4 {offsets = [2, 0], sizes = [1, 24], strides = [1, 1]} : vector<6x24xf32> to vector<1x24xf32>
    %8 = vector.extract_strided_slice %4 {offsets = [3, 0], sizes = [1, 24], strides = [1, 1]} : vector<6x24xf32> to vector<1x24xf32>
    %9 = vector.extract_strided_slice %4 {offsets = [4, 0], sizes = [1, 24], strides = [1, 1]} : vector<6x24xf32> to vector<1x24xf32>
    %10 = vector.extract_strided_slice %4 {offsets = [5, 0], sizes = [1, 24], strides = [1, 1]} : vector<6x24xf32> to vector<1x24xf32>
    %c0_3 = arith.constant 0 : index
    %c0_4 = arith.constant 0 : index
    %c0_5 = arith.constant 0 : index
    %11 = vector.load %arg12[%c0_3, %c0_4, %c0_5] : memref<2x8x24xf32, #tpu.memory_space<vmem>>, vector<2x8x24xf32>
    %12 = vector.shape_cast %11 : vector<2x8x24xf32> to vector<16x24xf32>
    %13 = arith.truncf %12 : vector<16x24xf32> to vector<16x24xbf16>
    %c0_6 = arith.constant 0 : index
    %c0_7 = arith.constant 0 : index
    %c0_8 = arith.constant 0 : index
    %14 = vector.load %arg5[%c0_6, %c0_7, %c0_8] : memref<1x24x384xbf16, #tpu.memory_space<vmem>>, vector<1x24x384xbf16>
    %15 = vector.shape_cast %14 : vector<1x24x384xbf16> to vector<24x384xbf16>
    %cst = arith.constant dense<0.000000e+00> : vector<16x384xf32>
    %16 = tpu.matmul %13, %15, %cst {dimension_numbers = #tpu.dot_dimension_numbers<[1], [0], [0], [1], [0, 0, 1, 1], [], []>} : vector<16x24xbf16>, vector<24x384xbf16>, vector<16x384xf32> -> vector<16x384xf32>
    %c0_9 = arith.constant 0 : index
    %c0_10 = arith.constant 0 : index
    %c0_11 = arith.constant 0 : index
    %17 = vector.load %arg6[%c0_9, %c0_10, %c0_11] : memref<1x1x384xf32, #tpu.memory_space<vmem>>, vector<1x1x384xf32>
    %18 = vector.shape_cast %17 : vector<1x1x384xf32> to vector<1x384xf32>
    %19 = vector.broadcast %18 : vector<1x384xf32> to vector<16x384xf32>
    %20 = arith.addf %16, %19 : vector<16x384xf32>
    %21 = arith.truncf %20 : vector<16x384xf32> to vector<16x384xbf16>
    %22 = vector.extract_strided_slice %21 {offsets = [0, 0], sizes = [16, 128], strides = [1, 1]} : vector<16x384xbf16> to vector<16x128xbf16>
    %23 = vector.shape_cast %22 : vector<16x128xbf16> to vector<2x8x128xbf16>
    %24 = vector.extract_strided_slice %21 {offsets = [0, 128], sizes = [16, 128], strides = [1, 1]} : vector<16x384xbf16> to vector<16x128xbf16>
    %25 = vector.shape_cast %24 : vector<16x128xbf16> to vector<2x8x128xbf16>
    %26 = vector.extract_strided_slice %21 {offsets = [0, 256], sizes = [16, 128], strides = [1, 1]} : vector<16x384xbf16> to vector<16x128xbf16>
    %27 = vector.shape_cast %26 : vector<16x128xbf16> to vector<2x8x128xbf16>
    "tpu.trace_start"() <{level = 10 : i32, message = "bqh,bkh->bqk"}> : () -> ()
    %cst_12 = arith.constant dense<0.000000e+00> : vector<2x8x8xf32>
    %28 = tpu.matmul %23, %25, %cst_12 {dimension_numbers = #tpu.dot_dimension_numbers<[2], [2], [1], [1], [0, 0, 0, 1, 1, 1], [0], [0]>} : vector<2x8x128xbf16>, vector<2x8x128xbf16>, vector<2x8x8xf32> -> vector<2x8x8xf32>
    "tpu.trace_stop"() : () -> ()
    %cst_13 = arith.constant dense<0xFF800000> : vector<2x8xf32>
    %29 = vector.multi_reduction <maximumf>, %28, %cst_13 [2] : vector<2x8x8xf32> to vector<2x8xf32>
    %30 = vector.shape_cast %29 : vector<2x8xf32> to vector<2x8x1xf32>
    %31 = vector.broadcast %30 : vector<2x8x1xf32> to vector<2x8x8xf32>
    %32 = arith.subf %28, %31 : vector<2x8x8xf32>
    %33 = math.exp %32 : vector<2x8x8xf32>
    %cst_14 = arith.constant dense<0.000000e+00> : vector<2x8xf32>
    %34 = vector.multi_reduction <add>, %33, %cst_14 [2] : vector<2x8x8xf32> to vector<2x8xf32>
    %35 = vector.shape_cast %34 : vector<2x8xf32> to vector<2x8x1xf32>
    %36 = tpu.reciprocal %35 {approx = true} : vector<2x8x1xf32> -> vector<2x8x1xf32>
    %37 = vector.broadcast %36 : vector<2x8x1xf32> to vector<2x8x8xf32>
    %38 = arith.mulf %33, %37 : vector<2x8x8xf32>
    %39 = arith.truncf %38 : vector<2x8x8xf32> to vector<2x8x8xbf16>
    %c0_15 = arith.constant 0 : index
    %c0_16 = arith.constant 0 : index
    %c0_17 = arith.constant 0 : index
    %c0_18 = arith.constant 0 : index
    %40 = vector.load %arg13[%c0_15, %c0_16, %c0_17, %c0_18] : memref<1x2x8x8xbf16, #tpu.memory_space<vmem>>, vector<1x2x8x8xbf16>
    %41 = vector.shape_cast %40 : vector<1x2x8x8xbf16> to vector<2x8x8xbf16>
    %42 = vector.shape_cast %39 : vector<2x8x8xbf16> to vector<1x2x8x8xbf16>
    tpu.vector_store %arg13[%c0_15, %c0_16, %c0_17, %c0_18], %42 {strides = array<i32>} : memref<1x2x8x8xbf16, #tpu.memory_space<vmem>>, vector<1x2x8x8xbf16>,
    "tpu.trace_start"() <{level = 10 : i32, message = "bqk,bkh->bqh"}> : () -> ()
    %cst_19 = arith.constant dense<0.000000e+00> : vector<2x8x128xf32>
    %43 = tpu.matmul %39, %27, %cst_19 {dimension_numbers = #tpu.dot_dimension_numbers<[2], [1], [1], [2], [0, 0, 0, 1, 1, 2], [0], [0]>} : vector<2x8x8xbf16>, vector<2x8x128xbf16>, vector<2x8x128xf32> -> vector<2x8x128xf32>
    "tpu.trace_stop"() : () -> ()
    %44 = vector.shape_cast %43 : vector<2x8x128xf32> to vector<16x128xf32>
    %45 = arith.truncf %44 : vector<16x128xf32> to vector<16x128xbf16>
    %c0_20 = arith.constant 0 : index
    %c0_21 = arith.constant 0 : index
    %c0_22 = arith.constant 0 : index
    %46 = vector.load %arg7[%c0_20, %c0_21, %c0_22] : memref<1x128x24xbf16, #tpu.memory_space<vmem>>, vector<1x128x24xbf16>
    %47 = vector.shape_cast %46 : vector<1x128x24xbf16> to vector<128x24xbf16>
    %cst_23 = arith.constant dense<0.000000e+00> : vector<16x24xf32>
    %48 = tpu.matmul %45, %47, %cst_23 {dimension_numbers = #tpu.dot_dimension_numbers<[1], [0], [0], [1], [0, 0, 1, 1], [], []>} : vector<16x128xbf16>, vector<128x24xbf16>, vector<16x24xf32> -> vector<16x24xf32>
    %49 = vector.broadcast %5 : vector<1x24xf32> to vector<16x24xf32>
    %50 = arith.addf %48, %49 : vector<16x24xf32>
    %51 = arith.addf %12, %50 : vector<16x24xf32>
    %cst_24 = arith.constant dense<0.000000e+00> : vector<16xf32>
    %52 = vector.multi_reduction <add>, %51, %cst_24 [1] : vector<16x24xf32> to vector<16xf32>
    %53 = vector.shape_cast %52 : vector<16xf32> to vector<16x1xf32>
    %cst_25 = arith.constant 2.400000e+01 : f32
    %54 = vector.broadcast %cst_25 : f32 to vector<16x1xf32>
    %55 = arith.divf %53, %54 : vector<16x1xf32>
    %56 = vector.broadcast %55 : vector<16x1xf32> to vector<16x24xf32>
    %57 = arith.subf %51, %56 : vector<16x24xf32>
    %58 = arith.mulf %57, %57 : vector<16x24xf32>
    %cst_26 = arith.constant dense<0.000000e+00> : vector<16xf32>
    %59 = vector.multi_reduction <add>, %58, %cst_26 [1] : vector<16x24xf32> to vector<16xf32>
    %60 = vector.shape_cast %59 : vector<16xf32> to vector<16x1xf32>
    %cst_27 = arith.constant 2.400000e+01 : f32
    %61 = vector.broadcast %cst_27 : f32 to vector<16x1xf32>
    %62 = arith.divf %60, %61 : vector<16x1xf32>
    %63 = vector.broadcast %55 : vector<16x1xf32> to vector<16x24xf32>
    %64 = arith.subf %51, %63 : vector<16x24xf32>
    %cst_28 = arith.constant 9.99999974E-6 : f32
    %65 = vector.broadcast %cst_28 : f32 to vector<16x1xf32>
    %66 = arith.addf %62, %65 : vector<16x1xf32>
    %67 = math.rsqrt %66 : vector<16x1xf32>
    %68 = vector.broadcast %67 : vector<16x1xf32> to vector<16x24xf32>
    %69 = arith.mulf %64, %68 : vector<16x24xf32>
    %70 = vector.broadcast %7 : vector<1x24xf32> to vector<16x24xf32>
    %71 = arith.mulf %69, %70 : vector<16x24xf32>
    %72 = vector.broadcast %8 : vector<1x24xf32> to vector<16x24xf32>
    %73 = arith.addf %71, %72 : vector<16x24xf32>
    %74 = arith.truncf %73 : vector<16x24xf32> to vector<16x24xbf16>
    %c0_29 = arith.constant 0 : index
    %c0_30 = arith.constant 0 : index
    %c0_31 = arith.constant 0 : index
    %75 = vector.load %arg8[%c0_29, %c0_30, %c0_31] : memref<1x24x32xbf16, #tpu.memory_space<vmem>>, vector<1x24x32xbf16>
    %76 = vector.shape_cast %75 : vector<1x24x32xbf16> to vector<24x32xbf16>
    %cst_32 = arith.constant dense<0.000000e+00> : vector<16x32xf32>
    %77 = tpu.matmul %74, %76, %cst_32 {dimension_numbers = #tpu.dot_dimension_numbers<[1], [0], [0], [1], [0, 0, 1, 1], [], []>} : vector<16x24xbf16>, vector<24x32xbf16>, vector<16x32xf32> -> vector<16x32xf32>
    %c0_33 = arith.constant 0 : index
    %c0_34 = arith.constant 0 : index
    %c0_35 = arith.constant 0 : index
    %78 = vector.load %arg9[%c0_33, %c0_34, %c0_35] : memref<1x1x32xf32, #tpu.memory_space<vmem>>, vector<1x1x32xf32>
    %79 = vector.shape_cast %78 : vector<1x1x32xf32> to vector<1x32xf32>
    %80 = vector.broadcast %79 : vector<1x32xf32> to vector<16x32xf32>
    %81 = arith.addf %77, %80 : vector<16x32xf32>
    %cst_36 = arith.constant 0.000000e+00 : f32
    %82 = vector.broadcast %cst_36 : f32 to vector<16x32xf32>
    %83 = arith.maximumf %81, %82 : vector<16x32xf32>
    %84 = arith.truncf %83 : vector<16x32xf32> to vector<16x32xbf16>
    %c0_37 = arith.constant 0 : index
    %c0_38 = arith.constant 0 : index
    %c0_39 = arith.constant 0 : index
    %85 = vector.load %arg10[%c0_37, %c0_38, %c0_39] : memref<1x32x24xbf16, #tpu.memory_space<vmem>>, vector<1x32x24xbf16>
    %86 = vector.shape_cast %85 : vector<1x32x24xbf16> to vector<32x24xbf16>
    %cst_40 = arith.constant dense<0.000000e+00> : vector<16x24xf32>
    %87 = tpu.matmul %84, %86, %cst_40 {dimension_numbers = #tpu.dot_dimension_numbers<[1], [0], [0], [1], [0, 0, 1, 1], [], []>} : vector<16x32xbf16>, vector<32x24xbf16>, vector<16x24xf32> -> vector<16x24xf32>
    %88 = vector.broadcast %6 : vector<1x24xf32> to vector<16x24xf32>
    %89 = arith.addf %87, %88 : vector<16x24xf32>
    %90 = arith.addf %73, %89 : vector<16x24xf32>
    %cst_41 = arith.constant dense<0.000000e+00> : vector<16xf32>
    %91 = vector.multi_reduction <add>, %90, %cst_41 [1] : vector<16x24xf32> to vector<16xf32>
    %92 = vector.shape_cast %91 : vector<16xf32> to vector<16x1xf32>
    %cst_42 = arith.constant 2.400000e+01 : f32
    %93 = vector.broadcast %cst_42 : f32 to vector<16x1xf32>
    %94 = arith.divf %92, %93 : vector<16x1xf32>
    %95 = vector.broadcast %94 : vector<16x1xf32> to vector<16x24xf32>
    %96 = arith.subf %90, %95 : vector<16x24xf32>
    %97 = arith.mulf %96, %96 : vector<16x24xf32>
    %cst_43 = arith.constant dense<0.000000e+00> : vector<16xf32>
    %98 = vector.multi_reduction <add>, %97, %cst_43 [1] : vector<16x24xf32> to vector<16xf32>
    %99 = vector.shape_cast %98 : vector<16xf32> to vector<16x1xf32>
    %cst_44 = arith.constant 2.400000e+01 : f32
    %100 = vector.broadcast %cst_44 : f32 to vector<16x1xf32>
    %101 = arith.divf %99, %100 : vector<16x1xf32>
    %102 = vector.broadcast %94 : vector<16x1xf32> to vector<16x24xf32>
    %103 = arith.subf %90, %102 : vector<16x24xf32>
    %cst_45 = arith.constant 9.99999974E-6 : f32
    %104 = vector.broadcast %cst_45 : f32 to vector<16x1xf32>
    %105 = arith.addf %101, %104 : vector<16x1xf32>
    %106 = math.rsqrt %105 : vector<16x1xf32>
    %107 = vector.broadcast %106 : vector<16x1xf32> to vector<16x24xf32>
    %108 = arith.mulf %103, %107 : vector<16x24xf32>
    %109 = vector.broadcast %9 : vector<1x24xf32> to vector<16x24xf32>
    %110 = arith.mulf %108, %109 : vector<16x24xf32>
    %111 = vector.broadcast %10 : vector<1x24xf32> to vector<16x24xf32>
    %112 = arith.addf %110, %111 : vector<16x24xf32>
    %113 = vector.shape_cast %112 : vector<16x24xf32> to vector<2x8x24xf32>
    %c0_46 = arith.constant 0 : index
    %c0_47 = arith.constant 0 : index
    %c0_48 = arith.constant 0 : index
    %114 = vector.load %arg12[%c0_46, %c0_47, %c0_48] : memref<2x8x24xf32, #tpu.memory_space<vmem>>, vector<2x8x24xf32>
    tpu.vector_store %arg12[%c0_46, %c0_47, %c0_48], %113 {strides = array<i32>} : memref<2x8x24xf32, #tpu.memory_space<vmem>>, vector<2x8x24xf32>,
    return
  }
  func.func @transform_0(%arg0: i32, %arg1: i32) -> (i32, i32, i32) {
    %c0_i32 = arith.constant 0 : i32
    %c0_i32_0 = arith.constant 0 : i32
    %c0_i32_1 = arith.constant 0 : i32
    return %arg0, %c0_i32, %c0_i32_0 : i32, i32, i32
  }
  func.func @transform_1(%arg0: i32, %arg1: i32) -> (i32, i32, i32) {
    %c0_i32 = arith.constant 0 : i32
    %c0_i32_0 = arith.constant 0 : i32
    %c0_i32_1 = arith.constant 0 : i32
    return %arg0, %c0_i32, %c0_i32_0 : i32, i32, i32
  }
  func.func @transform_2(%arg0: i32, %arg1: i32) -> (i32, i32, i32) {
    %c0_i32 = arith.constant 0 : i32
    %c0_i32_0 = arith.constant 0 : i32
    %c0_i32_1 = arith.constant 0 : i32
    return %arg0, %c0_i32, %c0_i32_0 : i32, i32, i32
  }
  func.func @transform_3(%arg0: i32, %arg1: i32) -> (i32, i32, i32) {
    %c0_i32 = arith.constant 0 : i32
    %c0_i32_0 = arith.constant 0 : i32
    %c0_i32_1 = arith.constant 0 : i32
    return %arg1, %c0_i32, %c0_i32_0 : i32, i32, i32
  }
  func.func @transform_4(%arg0: i32, %arg1: i32) -> (i32, i32, i32) {
    %c0_i32 = arith.constant 0 : i32
    %c0_i32_0 = arith.constant 0 : i32
    %c0_i32_1 = arith.constant 0 : i32
    return %arg1, %c0_i32, %c0_i32_0 : i32, i32, i32
  }
  func.func @transform_5(%arg0: i32, %arg1: i32) -> (i32, i32, i32) {
    %c0_i32 = arith.constant 0 : i32
    %c0_i32_0 = arith.constant 0 : i32
    %c0_i32_1 = arith.constant 0 : i32
    return %arg1, %c0_i32, %c0_i32_0 : i32, i32, i32
  }
  func.func @transform_6(%arg0: i32, %arg1: i32) -> (i32, i32, i32) {
    %c0_i32 = arith.constant 0 : i32
    %c0_i32_0 = arith.constant 0 : i32
    %c0_i32_1 = arith.constant 0 : i32
    return %arg1, %c0_i32, %c0_i32_0 : i32, i32, i32
  }
  func.func @transform_7(%arg0: i32, %arg1: i32) -> (i32, i32, i32) {
    %c0_i32 = arith.constant 0 : i32
    %c0_i32_0 = arith.constant 0 : i32
    %c0_i32_1 = arith.constant 0 : i32
    return %arg1, %c0_i32, %c0_i32_0 : i32, i32, i32
  }
  func.func @transform_8(%arg0: i32, %arg1: i32) -> (i32, i32, i32) {
    %c0_i32 = arith.constant 0 : i32
    %c0_i32_0 = arith.constant 0 : i32
    %c0_i32_1 = arith.constant 0 : i32
    return %arg1, %c0_i32, %c0_i32_0 : i32, i32, i32
  }
  func.func @transform_9(%arg0: i32, %arg1: i32) -> (i32, i32, i32) {
    %c0_i32 = arith.constant 0 : i32
    %c0_i32_0 = arith.constant 0 : i32
    %c0_i32_1 = arith.constant 0 : i32
    return %arg1, %c0_i32, %c0_i32_0 : i32, i32, i32
  }
  func.func @transform_10(%arg0: i32, %arg1: i32) -> (i32, i32, i32) {
    %c0_i32 = arith.constant 0 : i32
    %c0_i32_0 = arith.constant 0 : i32
    %c0_i32_1 = arith.constant 0 : i32
    return %arg0, %c0_i32, %c0_i32_0 : i32, i32, i32
  }
  func.func @transform_11(%arg0: i32, %arg1: i32) -> (i32, i32, i32, i32) {
    %c0_i32 = arith.constant 0 : i32
    %c0_i32_0 = arith.constant 0 : i32
    %c0_i32_1 = arith.constant 0 : i32
    return %arg1, %arg0, %c0_i32, %c0_i32_0 : i32, i32, i32, i32
  }
}

</mosaic_0001>

<llo_original>
// kernel: tpu_custom_call.1
$region0: #{tpu_custom_call.1}
  #allocation0 [shape = 'u32[]', space=smem, size = 0x4, offset = 0x4, fixed_abs, tag = 'smem constant byte address 0x4 - core index']
  #allocation1 [shape = 'u32[72,128]{1,0:T(1,128)}', space=vmem, size = 0x9000, scoped, tag = 'internal scratch']
  %s0 = inlined_call_operand.vmem [shape: f32[2,8,8], index: 0, kind: input, shape index: {}]
  %s1 = inlined_call_operand.vmem [shape: f32[2,8,8], index: 1, kind: input, shape index: {}]
  %s2 = inlined_call_operand.vmem [shape: f32[2,8,8], index: 2, kind: input, shape index: {}]
  %s3 = inlined_call_operand.vmem [shape: bf16[2,24,384], index: 3, kind: input, shape index: {}]
  %s4 = inlined_call_operand.vmem [shape: f32[2,1,384], index: 4, kind: input, shape index: {}]
  %s5 = inlined_call_operand.vmem [shape: bf16[2,128,24], index: 5, kind: input, shape index: {}]
  %s6 = inlined_call_operand.vmem [shape: bf16[2,24,32], index: 6, kind: input, shape index: {}]
  %s7 = inlined_call_operand.vmem [shape: f32[2,1,32], index: 7, kind: input, shape index: {}]
  %s8 = inlined_call_operand.vmem [shape: bf16[2,32,24], index: 8, kind: input, shape index: {}]
  %s9 = inlined_call_operand.vmem [shape: f32[2,6,24], index: 9, kind: input, shape index: {}]
  %s10 = inlined_call_operand.hbm [shape: f32[2,8,24], index: 10, kind: output, shape index: {0}]
  %s11 = inlined_call_operand.hbm [shape: bf16[2,2,8,8], index: 11, kind: output, shape index: {1}]
  %12 = xla_tuple %s10, %s11
  %s13 = sld [smem:[#allocation0]]
  $region85: #{tpu_custom_call.1} parent=0
    _
  %s15 = ssub.s32 1, %s13
  %s16 = scalar_select 0, %s15, %s13
  $region1: #{tpu_custom_call.1} parent=0
    #allocation2 [shape = 'u8[8192]{0}', space=vmem, size = 0x2000, scoped, tag = 'output window, operand 0, single buffered']
    #allocation3 [shape = 's32[2]{0}', space=sflag, size = 0x8, scoped, tag = 'scoped memory for tpu_custom_call.1']
    #allocation4 [shape = 'u8[8192]{0}', space=vmem, size = 0x2000, scoped, tag = 'output window, operand 1']
    #allocation5 [shape = 's32[2]{0}', space=sflag, size = 0x8, scoped, tag = 'scoped memory for tpu_custom_call.1']
    %17 = vsyncpa [#allocation3], 0
    %18 = vsyncpa [#allocation5], 0
    %s19 = scalar_lea.sflag [#allocation5], 1
    %20 = vsyncpa %s19, 0
    loop: start=0, step=1, limit=4
    $region2: #{tpu_custom_call.1} parent=1 // loop_pre_header
      _
    $region3: #{tpu_custom_call.1} parent=1 // loop_header
      %s22 = sphi 0, %s26
      %p23 = scmp.ge.s32.totalorder %s22, 4
      %s29 = sphi 0, %s41
      %s30 = sphi 0, %s37
      %s31 = sphi 0, %s29
      %s32 = sphi 0, %s30
      %s33 = sphi 0, %s31
      %s34 = sphi 0, %s32
      %s44 = sphi 0, %s46
      %s47 = sphi 0, %s44
      %s48 = sphi 0, %s47
      %s64 = sphi 0, %s48
      %s70 = sphi 0, %s72
      %s73 = sphi 0, %s70
      %s74 = sphi 0, %s73
      %s90 = sphi 0, %s74
      %s96 = sphi 0, %s98
      %s99 = sphi 0, %s96
      %s100 = sphi 0, %s99
      %s116 = sphi 0, %s100
      %s122 = sphi 0, %s124
      %s125 = sphi 0, %s122
      %s126 = sphi 0, %s125
      %s142 = sphi 0, %s126
      %s148 = sphi 0, %s150
      %s151 = sphi 0, %s148
      %s152 = sphi 0, %s151
      %s168 = sphi 0, %s152
      %s174 = sphi 0, %s176
      %s177 = sphi 0, %s174
      %s178 = sphi 0, %s177
      %s194 = sphi 0, %s178
      %s200 = sphi 0, %s202
      %s203 = sphi 0, %s200
      %s204 = sphi 0, %s203
      %s220 = sphi 0, %s204
      %s226 = sphi 0, %s228
      %s229 = sphi 0, %s226
      %s230 = sphi 0, %s229
      %s246 = sphi 0, %s230
      %s252 = sphi 0, %s254
      %s255 = sphi 0, %s252
      %s256 = sphi 0, %s255
      %s272 = sphi 0, %s256
      %s278 = sphi 0, %s280
      %s281 = sphi 0, %s278
      %s282 = sphi 0, %s281
      %s298 = sphi 0, %s282
      %s304 = sphi 0, %s306
      %s307 = sphi 0, %s304
      %s308 = sphi 0, %s307
      %s324 = sphi 0, %s308
      %s332 = sphi 0, %s334
      %s335 = sphi 0, %s332
      %s336 = sphi 0, %s335
      %s352 = sphi 0, %s336
    $region4: #{tpu_custom_call.1} parent=1 // loop_header_branch
      %25 = sbr.rel (%p23) target = $region8
    $region5: #{tpu_custom_call.1} parent=1 // loop_body
      %s27 = ssub.s32 %s22, 1
      %s28 = ssub.s32 %s22, 2
      %s35 = sadd.s32 1, %s30
      %p36 = scmp.ge.s32.totalorder %s35, 2
      %s37 = scalar_select %p36, 0, %s35
      %s38 = sadd.s32 1, %s29
      %s39 = scalar_select %p36, %s38, %s29
      %p40 = scmp.ge.s32.totalorder %s39, 1
      %s41 = scalar_select %p40, 0, %s39
      %s42 = ssub.s32 %s29, %s41
      %p43 = scmp.eq.s32.totalorder %s42, 0
      %s45 = sadd.s32 %s44, 1
      %s46 = scalar_select %p43, %s44, %s45
      %p49 = pneg %p43
      %p50 = scmp.eq.s32.totalorder %s22, 1
      %p51 = por %p49, %p50
      %p52 = scmp.ne.s32.totalorder %s44, %s47
      %p53 = scmp.eq.s32.totalorder %s22, 0
      %p54 = por %p52, %p53
      %p55 = scmp.ne.s32.totalorder %s44, %s47
      %p56 = scmp.eq.s32.totalorder %s27, 1
      %p57 = por %p55, %p56
      %p58 = scmp.ne.s32.totalorder %s47, %s48
      %p59 = scmp.eq.s32.totalorder %s27, 0
      %p60 = por %p58, %p59
      %p61 = scmp.ne.s32.totalorder %s47, %s48
      %p62 = scmp.eq.s32.totalorder %s28, 1
      %p63 = por %p61, %p62
      %p65 = scmp.ne.s32.totalorder %s48, %s64
      %p66 = scmp.eq.s32.totalorder %s28, 0
      %p67 = por %p65, %p66
      %s68 = ssub.s32 %s29, %s41
      %p69 = scmp.eq.s32.totalorder %s68, 0
      %s71 = sadd.s32 %s70, 1
      %s72 = scalar_select %p69, %s70, %s71
      %p75 = pneg %p69
      %p76 = scmp.eq.s32.totalorder %s22, 1
      %p77 = por %p75, %p76
      %p78 = scmp.ne.s32.totalorder %s70, %s73
      %p79 = scmp.eq.s32.totalorder %s22, 0
      %p80 = por %p78, %p79
      %p81 = scmp.ne.s32.totalorder %s70, %s73
      %p82 = scmp.eq.s32.totalorder %s27, 1
      %p83 = por %p81, %p82
      %p84 = scmp.ne.s32.totalorder %s73, %s74
      %p85 = scmp.eq.s32.totalorder %s27, 0
      %p86 = por %p84, %p85
      %p87 = scmp.ne.s32.totalorder %s73, %s74
      %p88 = scmp.eq.s32.totalorder %s28, 1
      %p89 = por %p87, %p88
      %p91 = scmp.ne.s32.totalorder %s74, %s90
      %p92 = scmp.eq.s32.totalorder %s28, 0
      %p93 = por %p91, %p92
      %s94 = ssub.s32 %s29, %s41
      %p95 = scmp.eq.s32.totalorder %s94, 0
      %s97 = sadd.s32 %s96, 1
      %s98 = scalar_select %p95, %s96, %s97
      %p101 = pneg %p95
      %p102 = scmp.eq.s32.totalorder %s22, 1
      %p103 = por %p101, %p102
      %p104 = scmp.ne.s32.totalorder %s96, %s99
      %p105 = scmp.eq.s32.totalorder %s22, 0
      %p106 = por %p104, %p105
      %p107 = scmp.ne.s32.totalorder %s96, %s99
      %p108 = scmp.eq.s32.totalorder %s27, 1
      %p109 = por %p107, %p108
      %p110 = scmp.ne.s32.totalorder %s99, %s100
      %p111 = scmp.eq.s32.totalorder %s27, 0
      %p112 = por %p110, %p111
      %p113 = scmp.ne.s32.totalorder %s99, %s100
      %p114 = scmp.eq.s32.totalorder %s28, 1
      %p115 = por %p113, %p114
      %p117 = scmp.ne.s32.totalorder %s100, %s116
      %p118 = scmp.eq.s32.totalorder %s28, 0
      %p119 = por %p117, %p118
      %s120 = ssub.s32 %s30, %s37
      %p121 = scmp.eq.s32.totalorder %s120, 0
      %s123 = sadd.s32 %s122, 1
      %s124 = scalar_select %p121, %s122, %s123
      %p127 = pneg %p121
      %p128 = scmp.eq.s32.totalorder %s22, 1
      %p129 = por %p127, %p128
      %p130 = scmp.ne.s32.totalorder %s122, %s125
      %p131 = scmp.eq.s32.totalorder %s22, 0
      %p132 = por %p130, %p131
      %p133 = scmp.ne.s32.totalorder %s122, %s125
      %p134 = scmp.eq.s32.totalorder %s27, 1
      %p135 = por %p133, %p134
      %p136 = scmp.ne.s32.totalorder %s125, %s126
      %p137 = scmp.eq.s32.totalorder %s27, 0
      %p138 = por %p136, %p137
      %p139 = scmp.ne.s32.totalorder %s125, %s126
      %p140 = scmp.eq.s32.totalorder %s28, 1
      %p141 = por %p139, %p140
      %p143 = scmp.ne.s32.totalorder %s126, %s142
      %p144 = scmp.eq.s32.totalorder %s28, 0
      %p145 = por %p143, %p144
      %s146 = ssub.s32 %s30, %s37
      %p147 = scmp.eq.s32.totalorder %s146, 0
      %s149 = sadd.s32 %s148, 1
      %s150 = scalar_select %p147, %s148, %s149
      %p153 = pneg %p147
      %p154 = scmp.eq.s32.totalorder %s22, 1
      %p155 = por %p153, %p154
      %p156 = scmp.ne.s32.totalorder %s148, %s151
      %p157 = scmp.eq.s32.totalorder %s22, 0
      %p158 = por %p156, %p157
      %p159 = scmp.ne.s32.totalorder %s148, %s151
      %p160 = scmp.eq.s32.totalorder %s27, 1
      %p161 = por %p159, %p160
      %p162 = scmp.ne.s32.totalorder %s151, %s152
      %p163 = scmp.eq.s32.totalorder %s27, 0
      %p164 = por %p162, %p163
      %p165 = scmp.ne.s32.totalorder %s151, %s152
      %p166 = scmp.eq.s32.totalorder %s28, 1
      %p167 = por %p165, %p166
      %p169 = scmp.ne.s32.totalorder %s152, %s168
      %p170 = scmp.eq.s32.totalorder %s28, 0
      %p171 = por %p169, %p170
      %s172 = ssub.s32 %s30, %s37
      %p173 = scmp.eq.s32.totalorder %s172, 0
      %s175 = sadd.s32 %s174, 1
      %s176 = scalar_select %p173, %s174, %s175
      %p179 = pneg %p173
      %p180 = scmp.eq.s32.totalorder %s22, 1
      %p181 = por %p179, %p180
      %p182 = scmp.ne.s32.totalorder %s174, %s177
      %p183 = scmp.eq.s32.totalorder %s22, 0
      %p184 = por %p182, %p183
      %p185 = scmp.ne.s32.totalorder %s174, %s177
      %p186 = scmp.eq.s32.totalorder %s27, 1
      %p187 = por %p185, %p186
      %p188 = scmp.ne.s32.totalorder %s177, %s178
      %p189 = scmp.eq.s32.totalorder %s27, 0
      %p190 = por %p188, %p189
      %p191 = scmp.ne.s32.totalorder %s177, %s178
      %p192 = scmp.eq.s32.totalorder %s28, 1
      %p193 = por %p191, %p192
      %p195 = scmp.ne.s32.totalorder %s178, %s194
      %p196 = scmp.eq.s32.totalorder %s28, 0
      %p197 = por %p195, %p196
      %s198 = ssub.s32 %s30, %s37
      %p199 = scmp.eq.s32.totalorder %s198, 0
      %s201 = sadd.s32 %s200, 1
      %s202 = scalar_select %p199, %s200, %s201
      %p205 = pneg %p199
      %p206 = scmp.eq.s32.totalorder %s22, 1
      %p207 = por %p205, %p206
      %p208 = scmp.ne.s32.totalorder %s200, %s203
      %p209 = scmp.eq.s32.totalorder %s22, 0
      %p210 = por %p208, %p209
      %p211 = scmp.ne.s32.totalorder %s200, %s203
      %p212 = scmp.eq.s32.totalorder %s27, 1
      %p213 = por %p211, %p212
      %p214 = scmp.ne.s32.totalorder %s203, %s204
      %p215 = scmp.eq.s32.totalorder %s27, 0
      %p216 = por %p214, %p215
      %p217 = scmp.ne.s32.totalorder %s203, %s204
      %p218 = scmp.eq.s32.totalorder %s28, 1
      %p219 = por %p217, %p218
      %p221 = scmp.ne.s32.totalorder %s204, %s220
      %p222 = scmp.eq.s32.totalorder %s28, 0
      %p223 = por %p221, %p222
      %s224 = ssub.s32 %s30, %s37
      %p225 = scmp.eq.s32.totalorder %s224, 0
      %s227 = sadd.s32 %s226, 1
      %s228 = scalar_select %p225, %s226, %s227
      %p231 = pneg %p225
      %p232 = scmp.eq.s32.totalorder %s22, 1
      %p233 = por %p231, %p232
      %p234 = scmp.ne.s32.totalorder %s226, %s229
      %p235 = scmp.eq.s32.totalorder %s22, 0
      %p236 = por %p234, %p235
      %p237 = scmp.ne.s32.totalorder %s226, %s229
      %p238 = scmp.eq.s32.totalorder %s27, 1
      %p239 = por %p237, %p238
      %p240 = scmp.ne.s32.totalorder %s229, %s230
      %p241 = scmp.eq.s32.totalorder %s27, 0
      %p242 = por %p240, %p241
      %p243 = scmp.ne.s32.totalorder %s229, %s230
      %p244 = scmp.eq.s32.totalorder %s28, 1
      %p245 = por %p243, %p244
      %p247 = scmp.ne.s32.totalorder %s230, %s246
      %p248 = scmp.eq.s32.totalorder %s28, 0
      %p249 = por %p247, %p248
      %s250 = ssub.s32 %s30, %s37
      %p251 = scmp.eq.s32.totalorder %s250, 0
      %s253 = sadd.s32 %s252, 1
      %s254 = scalar_select %p251, %s252, %s253
      %p257 = pneg %p251
      %p258 = scmp.eq.s32.totalorder %s22, 1
      %p259 = por %p257, %p258
      %p260 = scmp.ne.s32.totalorder %s252, %s255
      %p261 = scmp.eq.s32.totalorder %s22, 0
      %p262 = por %p260, %p261
      %p263 = scmp.ne.s32.totalorder %s252, %s255
      %p264 = scmp.eq.s32.totalorder %s27, 1
      %p265 = por %p263, %p264
      %p266 = scmp.ne.s32.totalorder %s255, %s256
      %p267 = scmp.eq.s32.totalorder %s27, 0
      %p268 = por %p266, %p267
      %p269 = scmp.ne.s32.totalorder %s255, %s256
      %p270 = scmp.eq.s32.totalorder %s28, 1
      %p271 = por %p269, %p270
      %p273 = scmp.ne.s32.totalorder %s256, %s272
      %p274 = scmp.eq.s32.totalorder %s28, 0
      %p275 = por %p273, %p274
      %s276 = ssub.s32 %s30, %s37
      %p277 = scmp.eq.s32.totalorder %s276, 0
      %s279 = sadd.s32 %s278, 1
      %s280 = scalar_select %p277, %s278, %s279
      %p283 = pneg %p277
      %p284 = scmp.eq.s32.totalorder %s22, 1
      %p285 = por %p283, %p284
      %p286 = scmp.ne.s32.totalorder %s278, %s281
      %p287 = scmp.eq.s32.totalorder %s22, 0
      %p288 = por %p286, %p287
      %p289 = scmp.ne.s32.totalorder %s278, %s281
      %p290 = scmp.eq.s32.totalorder %s27, 1
      %p291 = por %p289, %p290
      %p292 = scmp.ne.s32.totalorder %s281, %s282
      %p293 = scmp.eq.s32.totalorder %s27, 0
      %p294 = por %p292, %p293
      %p295 = scmp.ne.s32.totalorder %s281, %s282
      %p296 = scmp.eq.s32.totalorder %s28, 1
      %p297 = por %p295, %p296
      %p299 = scmp.ne.s32.totalorder %s282, %s298
      %p300 = scmp.eq.s32.totalorder %s28, 0
      %p301 = por %p299, %p300
      %s302 = ssub.s32 %s29, %s41
      %p303 = scmp.eq.s32.totalorder %s302, 0
      %s305 = sadd.s32 %s304, 1
      %s306 = scalar_select %p303, %s304, %s305
      %p309 = pneg %p303
      %p310 = scmp.eq.s32.totalorder %s22, 1
      %p311 = por %p309, %p310
      %p312 = scmp.ne.s32.totalorder %s304, %s307
      %p313 = scmp.eq.s32.totalorder %s22, 0
      %p314 = por %p312, %p313
      %p315 = scmp.ne.s32.totalorder %s304, %s307
      %p316 = scmp.eq.s32.totalorder %s27, 1
      %p317 = por %p315, %p316
      %p318 = scmp.ne.s32.totalorder %s307, %s308
      %p319 = scmp.eq.s32.totalorder %s27, 0
      %p320 = por %p318, %p319
      %p321 = scmp.ne.s32.totalorder %s307, %s308
      %p322 = scmp.eq.s32.totalorder %s28, 1
      %p323 = por %p321, %p322
      %p325 = scmp.ne.s32.totalorder %s308, %s324
      %p326 = scmp.eq.s32.totalorder %s28, 0
      %p327 = por %p325, %p326
      %s328 = ssub.s32 %s30, %s37
      %s329 = ssub.s32 %s29, %s41
      %s330 = sor.u32 %s328, %s329
      %p331 = scmp.eq.s32.totalorder %s330, 0
      %s333 = sadd.s32 %s332, 1
      %s334 = scalar_select %p331, %s332, %s333
      %p337 = pneg %p331
      %p338 = scmp.eq.s32.totalorder %s22, 1
      %p339 = por %p337, %p338
      %p340 = scmp.ne.s32.totalorder %s332, %s335
      %p341 = scmp.eq.s32.totalorder %s22, 0
      %p342 = por %p340, %p341
      %p343 = scmp.ne.s32.totalorder %s332, %s335
      %p344 = scmp.eq.s32.totalorder %s27, 1
      %p345 = por %p343, %p344
      %p346 = scmp.ne.s32.totalorder %s335, %s336
      %p347 = scmp.eq.s32.totalorder %s27, 0
      %p348 = por %p346, %p347
      %p349 = scmp.ne.s32.totalorder %s335, %s336
      %p350 = scmp.eq.s32.totalorder %s28, 1
      %p351 = por %p349, %p350
      %p353 = scmp.ne.s32.totalorder %s336, %s352
      %p354 = scmp.eq.s32.totalorder %s28, 0
      %p355 = por %p353, %p354
      %p356 = scmp.le.s32.totalorder 1, %s22
      %p357 = scmp.lt.s32.totalorder %s22, 3
      %p358 = pnand %p356, %p357
      %p359 = pneg %p358
      // Predicated region
      $region9: #{tpu_custom_call.1} parent=5 // pred_check
        _
      $region10: #{tpu_custom_call.1} parent=5 // pred_check_branch
        %361 = sbr.rel (%p358) target = $region12
      $region11: #{tpu_custom_call.1} parent=5 // pred_region
        %s362 = ssub.s32 %s22, 1
        // Predicated region
        $region13: #{tpu_custom_call.1} parent=11 // pred_check
          %p363 = pneg %p60
        $region14: #{tpu_custom_call.1} parent=11 // pred_check_branch
          %365 = sbr.rel (%p363) target = $region16
        $region15: #{tpu_custom_call.1} parent=11 // pred_region
          %s366 = smul.u32 2, %s31
          %p367 = scmp.lt.s32.totalorder %s366, 1
          %s368 = scalar_select %p367, %s366, 1
          %s369 = smul.addr %s368, 8
          %s370 = scalar_lea.vmem %s0, %s369
          %s371 = smul.u32 2, %s31
        $region16: #{tpu_custom_call.1} parent=11 // pred_fallthru
          _
        // Predicated region
        $region17: #{tpu_custom_call.1} parent=11 // pred_check
          %p372 = pneg %p86
        $region18: #{tpu_custom_call.1} parent=11 // pred_check_branch
          %374 = sbr.rel (%p372) target = $region20
        $region19: #{tpu_custom_call.1} parent=11 // pred_region
          %s375 = smul.u32 2, %s31
          %p376 = scmp.lt.s32.totalorder %s375, 1
          %s377 = scalar_select %p376, %s375, 1
          %s378 = smul.addr %s377, 8
          %s379 = scalar_lea.vmem %s1, %s378
          %s380 = smul.u32 2, %s31
        $region20: #{tpu_custom_call.1} parent=11 // pred_fallthru
          _
        // Predicated region
        $region21: #{tpu_custom_call.1} parent=11 // pred_check
          %p381 = pneg %p112
        $region22: #{tpu_custom_call.1} parent=11 // pred_check_branch
          %383 = sbr.rel (%p381) target = $region24
        $region23: #{tpu_custom_call.1} parent=11 // pred_region
          %s384 = smul.u32 2, %s31
          %p385 = scmp.lt.s32.totalorder %s384, 1
          %s386 = scalar_select %p385, %s384, 1
          %s387 = smul.addr %s386, 8
          %s388 = scalar_lea.vmem %s2, %s387
          %s389 = smul.u32 2, %s31
        $region24: #{tpu_custom_call.1} parent=11 // pred_fallthru
          _
      $region12: #{tpu_custom_call.1} parent=5 // pred_fallthru
        _
      %p390 = scmp.lt.s32.totalorder %s22, 2
      // Predicated region
      $region25: #{tpu_custom_call.1} parent=5 // pred_check
        %p391 = pneg %p390
      $region26: #{tpu_custom_call.1} parent=5 // pred_check_branch
        %393 = sbr.rel (%p391) target = $region28
      $region27: #{tpu_custom_call.1} parent=5 // pred_region
        // Predicated region
        $region29: #{tpu_custom_call.1} parent=27 // pred_check
          %p394 = pneg %p132
        $region30: #{tpu_custom_call.1} parent=27 // pred_check_branch
          %396 = sbr.rel (%p394) target = $region32
        $region31: #{tpu_custom_call.1} parent=27 // pred_region
          %p397 = scmp.lt.s32.totalorder %s30, 1
          %s398 = scalar_select %p397, %s30, 1
          %s399 = smul.addr %s398, 9
          %s400 = smul.addr %s399, 4
          %s401 = scalar_lea.vmem %s3, %s400
        $region32: #{tpu_custom_call.1} parent=27 // pred_fallthru
          _
        // Predicated region
        $region33: #{tpu_custom_call.1} parent=27 // pred_check
          %p402 = pneg %p158
        $region34: #{tpu_custom_call.1} parent=27 // pred_check_branch
          %404 = sbr.rel (%p402) target = $region36
        $region35: #{tpu_custom_call.1} parent=27 // pred_region
          %p405 = scmp.lt.s32.totalorder %s30, 1
          %s406 = scalar_select %p405, %s30, 1
          %s407 = smul.addr %s406, 3
          %s408 = scalar_lea.vmem %s4, %s407
        $region36: #{tpu_custom_call.1} parent=27 // pred_fallthru
          _
        // Predicated region
        $region37: #{tpu_custom_call.1} parent=27 // pred_check
          %p409 = pneg %p184
        $region38: #{tpu_custom_call.1} parent=27 // pred_check_branch
          %411 = sbr.rel (%p409) target = $region40
        $region39: #{tpu_custom_call.1} parent=27 // pred_region
          %p412 = scmp.lt.s32.totalorder %s30, 1
          %s413 = scalar_select %p412, %s30, 1
          %s414 = smul.addr %s413, 16
          %s415 = smul.addr %s414, 4
          %s416 = scalar_lea.vmem %s5, %s415
        $region40: #{tpu_custom_call.1} parent=27 // pred_fallthru
          _
        // Predicated region
        $region41: #{tpu_custom_call.1} parent=27 // pred_check
          %p417 = pneg %p210
        $region42: #{tpu_custom_call.1} parent=27 // pred_check_branch
          %419 = sbr.rel (%p417) target = $region44
        $region43: #{tpu_custom_call.1} parent=27 // pred_region
          %p420 = scmp.lt.s32.totalorder %s30, 1
          %s421 = scalar_select %p420, %s30, 1
          %s422 = smul.addr %s421, 3
          %s423 = smul.addr %s422, 4
          %s424 = scalar_lea.vmem %s6, %s423
        $region44: #{tpu_custom_call.1} parent=27 // pred_fallthru
          _
        // Predicated region
        $region45: #{tpu_custom_call.1} parent=27 // pred_check
          %p425 = pneg %p236
        $region46: #{tpu_custom_call.1} parent=27 // pred_check_branch
          %427 = sbr.rel (%p425) target = $region48
        $region47: #{tpu_custom_call.1} parent=27 // pred_region
          %p428 = scmp.lt.s32.totalorder %s30, 1
          %s429 = scalar_select %p428, %s30, 1
          %s430 = scalar_lea.vmem %s7, %s429
        $region48: #{tpu_custom_call.1} parent=27 // pred_fallthru
          _
        // Predicated region
        $region49: #{tpu_custom_call.1} parent=27 // pred_check
          %p431 = pneg %p262
        $region50: #{tpu_custom_call.1} parent=27 // pred_check_branch
          %433 = sbr.rel (%p431) target = $region52
        $region51: #{tpu_custom_call.1} parent=27 // pred_region
          %p434 = scmp.lt.s32.totalorder %s30, 1
          %s435 = scalar_select %p434, %s30, 1
          %s436 = smul.addr %s435, 4
          %s437 = smul.addr %s436, 4
          %s438 = scalar_lea.vmem %s8, %s437
        $region52: #{tpu_custom_call.1} parent=27 // pred_fallthru
          _
        // Predicated region
        $region53: #{tpu_custom_call.1} parent=27 // pred_check
          %p439 = pneg %p288
        $region54: #{tpu_custom_call.1} parent=27 // pred_check_branch
          %441 = sbr.rel (%p439) target = $region56
        $region55: #{tpu_custom_call.1} parent=27 // pred_region
          %p442 = scmp.lt.s32.totalorder %s30, 1
          %s443 = scalar_select %p442, %s30, 1
          %s444 = smul.addr %s443, 8
          %s445 = scalar_lea.vmem %s9, %s444
        $region56: #{tpu_custom_call.1} parent=27 // pred_fallthru
          _
      $region28: #{tpu_custom_call.1} parent=5 // pred_fallthru
        _
      %p446 = scmp.le.s32.totalorder 1, %s22
      %p447 = scmp.lt.s32.totalorder %s22, 3
      %p448 = pnand %p446, %p447
      %p449 = pneg %p448
      // Predicated region
      $region57: #{tpu_custom_call.1} parent=5 // pred_check
        _
      $region58: #{tpu_custom_call.1} parent=5 // pred_check_branch
        %451 = sbr.rel (%p448) target = $region60
      $region59: #{tpu_custom_call.1} parent=5 // pred_region
        %s452 = ssub.s32 %s22, 1
        %s453 = smul.u32 2, %s31
        %p454 = scmp.lt.s32.totalorder %s453, 1
        %s455 = scalar_select %p454, %s453, 1
        %s456 = smul.addr %s455, 8
        %s457 = scalar_lea.vmem %s0, %s456
        %p458 = pneg %p60
        %p459 = pneg %p57
        %s460 = smul.u32 2, %s31
        %p461 = scmp.lt.s32.totalorder %s460, 1
        %s462 = scalar_select %p461, %s460, 1
        %s463 = smul.addr %s462, 8
        %s464 = scalar_lea.vmem %s1, %s463
        %p465 = pneg %p86
        %p466 = pneg %p83
        %s467 = smul.u32 2, %s31
        %p468 = scmp.lt.s32.totalorder %s467, 1
        %s469 = scalar_select %p468, %s467, 1
        %s470 = smul.addr %s469, 8
        %s471 = scalar_lea.vmem %s2, %s470
        %p472 = pneg %p112
        %p473 = pneg %p109
        %p474 = scmp.lt.s32.totalorder %s32, 1
        %s475 = scalar_select %p474, %s32, 1
        %s476 = smul.addr %s475, 9
        %s477 = smul.addr %s476, 4
        %s478 = scalar_lea.vmem %s3, %s477
        %p479 = pneg %p138
        %p480 = pneg %p135
        %p481 = scmp.lt.s32.totalorder %s32, 1
        %s482 = scalar_select %p481, %s32, 1
        %s483 = smul.addr %s482, 3
        %s484 = scalar_lea.vmem %s4, %s483
        %p485 = pneg %p164
        %p486 = pneg %p161
        %p487 = scmp.lt.s32.totalorder %s32, 1
        %s488 = scalar_select %p487, %s32, 1
        %s489 = smul.addr %s488, 16
        %s490 = smul.addr %s489, 4
        %s491 = scalar_lea.vmem %s5, %s490
        %p492 = pneg %p190
        %p493 = pneg %p187
        %p494 = scmp.lt.s32.totalorder %s32, 1
        %s495 = scalar_select %p494, %s32, 1
        %s496 = smul.addr %s495, 3
        %s497 = smul.addr %s496, 4
        %s498 = scalar_lea.vmem %s6, %s497
        %p499 = pneg %p216
        %p500 = pneg %p213
        %p501 = scmp.lt.s32.totalorder %s32, 1
        %s502 = scalar_select %p501, %s32, 1
        %s503 = scalar_lea.vmem %s7, %s502
        %p504 = pneg %p242
        %p505 = pneg %p239
        %p506 = scmp.lt.s32.totalorder %s32, 1
        %s507 = scalar_select %p506, %s32, 1
        %s508 = smul.addr %s507, 4
        %s509 = smul.addr %s508, 4
        %s510 = scalar_lea.vmem %s8, %s509
        %p511 = pneg %p268
        %p512 = pneg %p265
        %p513 = scmp.lt.s32.totalorder %s32, 1
        %s514 = scalar_select %p513, %s32, 1
        %s515 = smul.addr %s514, 8
        %s516 = scalar_lea.vmem %s9, %s515
        %p517 = pneg %p294
        %p518 = pneg %p291
        %p519 = pneg %p320
        %p520 = pneg %p317
        %p521 = pneg %p348
        %p522 = pneg %p345
        %s523 = sand.u32 %s335, 1
        %s524 = scalar_lea.sflag [#allocation5], %s523
        %s525 = sand.u32 %s335, 1
        %s526 = smul.addr %s525, 8
        %s527 = scalar_lea.vmem [#allocation4], %s526
        %s528 = smul.u32 2, %s31
        %p529 = scmp.lt.s32.totalorder %s528, 1
        %s530 = scalar_select %p529, %s528, 1
        %s531 = smul.addr %s530, 8
        %s532 = scalar_lea.vmem %s0, %s531
        %s533 = smul.u32 2, %s31
        %s534 = smul.u32 2, %s31
        %p535 = scmp.lt.s32.totalorder %s534, 1
        %s536 = scalar_select %p535, %s534, 1
        %s537 = smul.addr %s536, 8
        %s538 = scalar_lea.vmem %s1, %s537
        %s539 = smul.u32 2, %s31
        %s540 = smul.u32 2, %s31
        %p541 = scmp.lt.s32.totalorder %s540, 1
        %s542 = scalar_select %p541, %s540, 1
        %s543 = smul.addr %s542, 8
        %s544 = scalar_lea.vmem %s2, %s543
        %s545 = smul.u32 2, %s31
        %p546 = scmp.lt.s32.totalorder %s32, 1
        %s547 = scalar_select %p546, %s32, 1
        %s548 = smul.addr %s547, 9
        %s549 = smul.addr %s548, 4
        %s550 = scalar_lea.vmem %s3, %s549
        %p551 = scmp.lt.s32.totalorder %s32, 1
        %s552 = scalar_select %p551, %s32, 1
        %s553 = smul.addr %s552, 3
        %s554 = scalar_lea.vmem %s4, %s553
        %p555 = scmp.lt.s32.totalorder %s32, 1
        %s556 = scalar_select %p555, %s32, 1
        %s557 = smul.addr %s556, 16
        %s558 = smul.addr %s557, 4
        %s559 = scalar_lea.vmem %s5, %s558
        %p560 = scmp.lt.s32.totalorder %s32, 1
        %s561 = scalar_select %p560, %s32, 1
        %s562 = smul.addr %s561, 3
        %s563 = smul.addr %s562, 4
        %s564 = scalar_lea.vmem %s6, %s563
        %p565 = scmp.lt.s32.totalorder %s32, 1
        %s566 = scalar_select %p565, %s32, 1
        %s567 = scalar_lea.vmem %s7, %s566
        %p568 = scmp.lt.s32.totalorder %s32, 1
        %s569 = scalar_select %p568, %s32, 1
        %s570 = smul.addr %s569, 4
        %s571 = smul.addr %s570, 4
        %s572 = scalar_lea.vmem %s8, %s571
        %p573 = scmp.lt.s32.totalorder %s32, 1
        %s574 = scalar_select %p573, %s32, 1
        %s575 = smul.addr %s574, 8
        %s576 = scalar_lea.vmem %s9, %s575
        %s577 = smul.u32 2, %s31
        %s578 = smul.u32 2, %s31
        %p580 = scmp.eq.s32.totalorder %s32, 0
        // Predicated region
        $region61: #{tpu_custom_call.1} parent=59 // pred_check
          %p581 = pneg %p580
        $region62: #{tpu_custom_call.1} parent=59 // pred_check_branch
          %583 = sbr.rel (%p581) target = $region64
        $region63: #{tpu_custom_call.1} parent=59 // pred_region
          %v584 = vld [vmem:[%s532] sm:$0xff]
          %v585 = vld [vmem:[%s532 + $0x8] sm:$0xff]
          %v586 = vld [vmem:[%s538] sm:$0xff]
          %v587 = vld [vmem:[%s538 + $0x8] sm:$0xff]
          %v588 = vld [vmem:[%s544] sm:$0xff]
          %v589 = vld [vmem:[%s544 + $0x8] sm:$0xff]
          %592 = vrot.lane.b32.xlu0 %v586, 8
          %v593 = vpop.permute.xlu0 %592
          %594 = vrot.lane.b32.xlu0 %v587, 8
          %v595 = vpop.permute.xlu0 %594
          %600 = vrot.lane.b32.xlu0 %v588, 16
          %v601 = vpop.permute.xlu0 %600
          %602 = vrot.lane.b32.xlu0 %v589, 16
          %v603 = vpop.permute.xlu0 %602
          %vm606 = vcmask 64512
          %v607 = vsel %vm606, %v584, %v593
          %v608 = vsel %vm606, %v585, %v595
          %vm609 = vcmask 130048
          %v610 = vsel %vm609, %v607, %v601
          %v611 = vsel %vm609, %v608, %v603
          %vm612 = vcmask 195584
          %613 = vst.msk [vmem:[#allocation2] sm:$0xff] %vm612, %v610
          %614 = vst.msk [vmem:[#allocation2 + $0x8] sm:$0xff] %vm612, %v611
        $region64: #{tpu_custom_call.1} parent=59 // pred_fallthru
          _
        %v615 = vld [vmem:[%s576] sm:$0x3f]
        %v616 = vld [vmem:[#allocation2] sm:$0xff]
        %v617 = vld [vmem:[#allocation2 + $0x8] sm:$0xff]
        %v618 = vpack.c.bf16 %v617, %v616
        %v619 = vld [vmem:[%s550] sm:$0xff]
        %v620 = vld [vmem:[%s550 + $0x8] sm:$0xf]
        %v621 = vld [vmem:[%s550 + $0xc] sm:$0xff]
        %v622 = vld [vmem:[%s550 + $0x14] sm:$0xf]
        %v623 = vld [vmem:[%s550 + $0x18] sm:$0xff]
        %v624 = vld [vmem:[%s550 + $0x20] sm:$0xf]
        %v625 = vld [vmem:[%s554] sm:$0x7]
        %v627 = vperm.slane %v625, 0
        %v628 = vperm.slane %v625, 1
        %v629 = vperm.slane %v625, 2
        %v639 = vunpack.c.l.b16 %v619
        %v640 = vunpack.c.h.b16 %v619
        %v641 = vunpack.c.l.b16 %v620
        %v642 = vunpack.c.l.b16 %v621
        %v643 = vunpack.c.h.b16 %v621
        %v644 = vunpack.c.l.b16 %v622
        %v645 = vunpack.c.l.b16 %v623
        %v646 = vunpack.c.h.b16 %v623
        %v647 = vunpack.c.l.b16 %v624
        %v648 = vpack.c.b16 %v642, %v639
        %v649 = vpack.c.b16 %v643, %v640
        %v650 = vpack.c.b16 %v644, %v641
        %v651 = vpack.c.b16 %v645, %v645
        %v652 = vpack.c.b16 %v646, %v646
        %v653 = vpack.c.b16 %v647, %v647
        %vm657 = vcmask 195584
        %v659 = vsel %vm657, %v618, 0
        %vm661 = vcmask 1043456
        %v663 = vsel %vm661, %v651, 0
        %v666 = vsel %vm661, %v652, 0
        %v669 = vsel %vm661, %v653, 0
        %671 = vmatpush.bf16.msra.mxu0 0
        %672 = vmatpush.bf16.msra.mxu0 0
        %673 = vmatpush.bf16.msra.mxu0 0
        %674 = vmatpush.bf16.msra.mxu0 0
        %675 = vmatpush.bf16.msra.mxu0 0
        %676 = vmatpush.bf16.msra.mxu0 0
        %677 = vmatpush.bf16.msra.mxu0 %v663
        %678 = vmatpush.bf16.msra.mxu0 %v648
        %679 = vmatmul.bf16.gmra.mxu0 %v659
        %v680 = vpop.f32.mrf.mxu0
        %v681 = vadd.f32 %v627, %v680
        %v682 = vpop.f32.mrf.mxu0
        %v683 = vadd.f32 %v627, %v682
        %684 = vdwg.mxu0
        %685 = vmatpush.bf16.msra.mxu0 0
        %686 = vmatpush.bf16.msra.mxu0 0
        %687 = vmatpush.bf16.msra.mxu0 0
        %688 = vmatpush.bf16.msra.mxu0 0
        %689 = vmatpush.bf16.msra.mxu0 0
        %690 = vmatpush.bf16.msra.mxu0 0
        %691 = vmatpush.bf16.msra.mxu0 %v666
        %692 = vmatpush.bf16.msra.mxu0 %v649
        %693 = vmatmul.bf16.gmra.mxu0 %v659
        %v694 = vpop.f32.mrf.mxu0
        %v695 = vadd.f32 %v628, %v694
        %v696 = vpop.f32.mrf.mxu0
        %v697 = vadd.f32 %v628, %v696
        %698 = vdwg.mxu0
        %699 = vmatpush.bf16.msra.mxu0 0
        %700 = vmatpush.bf16.msra.mxu0 0
        %701 = vmatpush.bf16.msra.mxu0 0
        %702 = vmatpush.bf16.msra.mxu0 0
        %703 = vmatpush.bf16.msra.mxu0 0
        %704 = vmatpush.bf16.msra.mxu0 0
        %705 = vmatpush.bf16.msra.mxu0 %v669
        %706 = vmatpush.bf16.msra.mxu0 %v650
        %707 = vmatmul.bf16.gmra.mxu0 %v659
        %v708 = vpop.f32.mrf.mxu0
        %v709 = vadd.f32 %v629, %v708
        %v710 = vpop.f32.mrf.mxu0
        %v711 = vadd.f32 %v629, %v710
        %712 = vdwg.mxu0
        %v713 = vpack.c.bf16 %v695, %v681
        %v714 = vpack.c.bf16 %v709, %v709
        %v715 = vpack.c.bf16 %v697, %v683
        %v716 = vpack.c.bf16 %v711, %v711
        %v719 = vrot.slane %v713, 4
        %v720 = vrot.slane %v715, 4
        %723 = vmatpush.bf16.xpose.msra.mxu0 0
        %724 = vmatpush.bf16.xpose.msra.mxu0 0
        %725 = vmatpush.bf16.xpose.msra.mxu0 0
        %726 = vmatpush.bf16.xpose.msra.mxu0 0
        %727 = vmatpush.bf16.xpose.msra.mxu0 0
        %728 = vmatpush.bf16.xpose.msra.mxu0 0
        %729 = vmatpush.bf16.xpose.msra.mxu0 0
        %730 = vmatpush.bf16.xpose.msra.mxu0 %v719
        %731 = vmatmul.bf16.gmra.mxu0 %v713
        %v732 = vpop.f32.mrf.mxu0
        %v733 = vadd.f32 0.0, %v732
        %v734 = vpop.f32.mrf.mxu0
        %735 = vdwg.mxu0
        %736 = vmatpush.bf16.xpose.msra.mxu0 0
        %737 = vmatpush.bf16.xpose.msra.mxu0 0
        %738 = vmatpush.bf16.xpose.msra.mxu0 0
        %739 = vmatpush.bf16.xpose.msra.mxu0 0
        %740 = vmatpush.bf16.xpose.msra.mxu0 0
        %741 = vmatpush.bf16.xpose.msra.mxu0 0
        %742 = vmatpush.bf16.xpose.msra.mxu0 0
        %743 = vmatpush.bf16.xpose.msra.mxu0 %v720
        %744 = vmatmul.bf16.gmra.mxu0 %v715
        %v745 = vpop.f32.mrf.mxu0
        %v746 = vadd.f32 0.0, %v745
        %v747 = vpop.f32.mrf.mxu0
        %748 = vdwg.mxu0
        %vm749 = vcmask 64512
        %v750 = vsel %vm749, %v733, -inf
        %751 = vmax.xlane.f32.xlu0 %v750
        %v752 = vpop.xlane.xlu0 %751
        %v753 = vsel %vm749, %v746, -inf
        %754 = vmax.xlane.f32.xlu0 %v753
        %v755 = vpop.xlane.xlu0 %754
        %v756 = vsub.f32 %v733, %v752
        %v757 = vsub.f32 %v746, %v755
        %v758 = vmul.f32 %v756, 1.442695
        %v759 = vpow.pop %v758
        %v760 = vmul.f32 %v757, 1.442695
        %v761 = vpow.pop %v760
        %v762 = vsel %vm749, %v759, 0.0
        %763 = vadd.xlane.f32.xlu0 %v762
        %v764 = vpop.xlane.xlu0 %763
        %v765 = vsel %vm749, %v761, 0.0
        %766 = vadd.xlane.f32.xlu0 %v765
        %v767 = vpop.xlane.xlu0 %766
        %v768 = vrcp.pop %v764
        %v769 = vrcp.pop %v767
        %v770 = vmul.f32 %v759, %v768
        %v771 = vmul.f32 %v761, %v769
        %v772 = vpack.c.bf16 %v770, %v770
        %v773 = vpack.c.bf16 %v771, %v771
        %vm774 = vcmask 60416
        %775 = vst.msk [vmem:[%s527] sm:$0xf] %vm774, %v772
        %776 = vst.msk [vmem:[%s527 + $0x4] sm:$0xf] %vm774, %v773
        %v778 = vsel %vm749, %v772, 0
        %v781 = vsel %vm661, %v714, 0
        %783 = vmatpush.bf16.msra.mxu0 0
        %784 = vmatpush.bf16.msra.mxu0 0
        %785 = vmatpush.bf16.msra.mxu0 0
        %786 = vmatpush.bf16.msra.mxu0 0
        %787 = vmatpush.bf16.msra.mxu0 0
        %788 = vmatpush.bf16.msra.mxu0 0
        %789 = vmatpush.bf16.msra.mxu0 0
        %790 = vmatpush.bf16.msra.mxu0 %v781
        %791 = vmatmul.bf16.gmra.mxu0 %v778
        %v792 = vpop.f32.mrf.mxu0
        %v793 = vadd.f32 0.0, %v792
        %v794 = vpop.f32.mrf.mxu0
        %795 = vdwg.mxu0
        %v797 = vsel %vm749, %v773, 0
        %v800 = vsel %vm661, %v716, 0
        %802 = vmatpush.bf16.msra.mxu0 0
        %803 = vmatpush.bf16.msra.mxu0 0
        %804 = vmatpush.bf16.msra.mxu0 0
        %805 = vmatpush.bf16.msra.mxu0 0
        %806 = vmatpush.bf16.msra.mxu0 0
        %807 = vmatpush.bf16.msra.mxu0 0
        %808 = vmatpush.bf16.msra.mxu0 0
        %809 = vmatpush.bf16.msra.mxu0 %v800
        %810 = vmatmul.bf16.gmra.mxu0 %v797
        %v811 = vpop.f32.mrf.mxu0
        %v812 = vadd.f32 0.0, %v811
        %v813 = vpop.f32.mrf.mxu0
        %814 = vdwg.mxu0
        %v815 = vpack.c.bf16 %v812, %v793
        %v816 = vld [vmem:[%s559] sm:$0xf]
        %v817 = vld [vmem:[%s559 + $0x4] sm:$0xf]
        %v818 = vld [vmem:[%s559 + $0x8] sm:$0xf]
        %v819 = vld [vmem:[%s559 + $0xc] sm:$0xf]
        %v820 = vld [vmem:[%s559 + $0x10] sm:$0xf]
        %v821 = vld [vmem:[%s559 + $0x14] sm:$0xf]
        %v822 = vld [vmem:[%s559 + $0x18] sm:$0xf]
        %v823 = vld [vmem:[%s559 + $0x1c] sm:$0xf]
        %v824 = vld [vmem:[%s559 + $0x20] sm:$0xf]
        %v825 = vld [vmem:[%s559 + $0x24] sm:$0xf]
        %v826 = vld [vmem:[%s559 + $0x28] sm:$0xf]
        %v827 = vld [vmem:[%s559 + $0x2c] sm:$0xf]
        %v828 = vld [vmem:[%s559 + $0x30] sm:$0xf]
        %v829 = vld [vmem:[%s559 + $0x34] sm:$0xf]
        %v830 = vld [vmem:[%s559 + $0x38] sm:$0xf]
        %v831 = vld [vmem:[%s559 + $0x3c] sm:$0xf]
        %v832 = vperm.slane %v615, 0
        %v849 = vunpack.c.l.b16 %v816
        %v850 = vunpack.c.l.b16 %v817
        %v851 = vunpack.c.l.b16 %v818
        %v852 = vunpack.c.l.b16 %v819
        %v853 = vunpack.c.l.b16 %v820
        %v854 = vunpack.c.l.b16 %v821
        %v855 = vunpack.c.l.b16 %v822
        %v856 = vunpack.c.l.b16 %v823
        %v857 = vunpack.c.l.b16 %v824
        %v858 = vunpack.c.l.b16 %v825
        %v859 = vunpack.c.l.b16 %v826
        %v860 = vunpack.c.l.b16 %v827
        %v861 = vunpack.c.l.b16 %v828
        %v862 = vunpack.c.l.b16 %v829
        %v863 = vunpack.c.l.b16 %v830
        %v864 = vunpack.c.l.b16 %v831
        %v865 = vpack.c.b16 %v850, %v849
        %v866 = vpack.c.b16 %v852, %v851
        %v867 = vpack.c.b16 %v854, %v853
        %v868 = vpack.c.b16 %v856, %v855
        %v869 = vpack.c.b16 %v858, %v857
        %v870 = vpack.c.b16 %v860, %v859
        %v871 = vpack.c.b16 %v862, %v861
        %v872 = vpack.c.b16 %v864, %v863
        %881 = vmatpush.bf16.msra.mxu0 %v872
        %882 = vmatpush.bf16.msra.mxu0 %v871
        %883 = vmatpush.bf16.msra.mxu0 %v870
        %884 = vmatpush.bf16.msra.mxu0 %v869
        %885 = vmatpush.bf16.msra.mxu0 %v868
        %886 = vmatpush.bf16.msra.mxu0 %v867
        %887 = vmatpush.bf16.msra.mxu0 %v866
        %888 = vmatpush.bf16.msra.mxu0 %v865
        %889 = vmatmul.bf16.gmra.mxu0 %v815
        %v890 = vpop.f32.mrf.mxu0
        %v891 = vadd.f32 %v832, %v890
        %v892 = vpop.f32.mrf.mxu0
        %v893 = vadd.f32 %v832, %v892
        %894 = vdwg.mxu0
        %v895 = vadd.f32 %v616, %v891
        %v896 = vadd.f32 %v617, %v893
        %v897 = vsel %vm657, %v895, 0.0
        %898 = vadd.xlane.f32.xlu0 %v897
        %v899 = vpop.xlane.xlu0 %898
        %v900 = vsel %vm657, %v896, 0.0
        %901 = vadd.xlane.f32.xlu0 %v900
        %v902 = vpop.xlane.xlu0 %901
        %v903 = vrcp.pop 24.0
        %v904 = vmul.f32 24.0, %v903
        %v905 = vsub.f32 1.0, %v904
        %v906 = vmul.f32 %v903, %v905
        %v907 = vadd.f32 %v903, %v906
        %vm908 = vweird.f32 %v903
        %v909 = vsel %vm908, %v903, %v907
        %v910 = vmul.f32 %v899, %v909
        %v911 = vmul.f32 %v902, %v909
        %v912 = vsub.f32 %v895, %v910
        %v913 = vsub.f32 %v896, %v911
        %v914 = vmul.f32 %v912, %v912
        %v915 = vmul.f32 %v913, %v913
        %v916 = vsel %vm657, %v914, 0.0
        %917 = vadd.xlane.f32.xlu0 %v916
        %v918 = vpop.xlane.xlu0 %917
        %v919 = vsel %vm657, %v915, 0.0
        %920 = vadd.xlane.f32.xlu0 %v919
        %v921 = vpop.xlane.xlu0 %920
        %v922 = vmul.f32 %v918, %v909
        %v923 = vmul.f32 %v921, %v909
        %v924 = vadd.f32 %v922, 1e-05
        %v925 = vadd.f32 %v923, 1e-05
        %v926 = vrsqrt.pop %v924
        %v927 = vmul.f32 %v926, %v924
        %v928 = vmul.f32 %v927, %v926
        %v929 = vmul.f32 0.5, %v928
        %v930 = vsub.f32 1.5, %v929
        %v931 = vmul.f32 %v926, %v930
        %vm932 = vweird.f32 %v924
        %vm933 = vweird.f32 %v926
        %vm934 = vmor %vm932, %vm933
        %v935 = vsel %vm934, %v926, %v931
        %v936 = vrsqrt.pop %v925
        %v937 = vmul.f32 %v936, %v925
        %v938 = vmul.f32 %v937, %v936
        %v939 = vmul.f32 0.5, %v938
        %v940 = vsub.f32 1.5, %v939
        %v941 = vmul.f32 %v936, %v940
        %vm942 = vweird.f32 %v925
        %vm943 = vweird.f32 %v936
        %vm944 = vmor %vm942, %vm943
        %v945 = vsel %vm944, %v936, %v941
        %v946 = vmul.f32 %v912, %v935
        %v947 = vmul.f32 %v913, %v945
        %v948 = vperm.slane %v615, 2
        %v949 = vmul.f32 %v946, %v948
        %v950 = vmul.f32 %v947, %v948
        %v951 = vperm.slane %v615, 3
        %v952 = vadd.f32 %v949, %v951
        %v953 = vadd.f32 %v950, %v951
        %v954 = vpack.c.bf16 %v953, %v952
        %v955 = vld [vmem:[%s564] sm:$0xf]
        %v956 = vld [vmem:[%s564 + $0x4] sm:$0xf]
        %v957 = vld [vmem:[%s564 + $0x8] sm:$0xf]
        %v958 = vld [vmem:[%s567] sm:$0x1]
        %v960 = vperm.slane %v958, 0
        %v965 = vunpack.c.l.b16 %v955
        %v966 = vunpack.c.l.b16 %v956
        %v967 = vunpack.c.l.b16 %v957
        %v968 = vpack.c.b16 %v966, %v965
        %v969 = vpack.c.b16 %v967, %v967
        %v972 = vsel %vm657, %v954, 0
        %v975 = vsel %vm661, %v969, 0
        %977 = vmatpush.bf16.msra.mxu0 0
        %978 = vmatpush.bf16.msra.mxu0 0
        %979 = vmatpush.bf16.msra.mxu0 0
        %980 = vmatpush.bf16.msra.mxu0 0
        %981 = vmatpush.bf16.msra.mxu0 0
        %982 = vmatpush.bf16.msra.mxu0 0
        %983 = vmatpush.bf16.msra.mxu0 %v975
        %984 = vmatpush.bf16.msra.mxu0 %v968
        %985 = vmatmul.bf16.gmra.mxu0 %v972
        %v986 = vpop.f32.mrf.mxu0
        %v987 = vadd.f32 %v960, %v986
        %v988 = vpop.f32.mrf.mxu0
        %v989 = vadd.f32 %v960, %v988
        %990 = vdwg.mxu0
        %v991 = vmax.f32 %v987, 0.0
        %v992 = vmax.f32 %v989, 0.0
        %v993 = vpack.c.bf16 %v992, %v991
        %v994 = vld [vmem:[%s572] sm:$0xf]
        %v995 = vld [vmem:[%s572 + $0x4] sm:$0xf]
        %v996 = vld [vmem:[%s572 + $0x8] sm:$0xf]
        %v997 = vld [vmem:[%s572 + $0xc] sm:$0xf]
        %v998 = vperm.slane %v615, 1
        %v1003 = vunpack.c.l.b16 %v994
        %v1004 = vunpack.c.l.b16 %v995
        %v1005 = vunpack.c.l.b16 %v996
        %v1006 = vunpack.c.l.b16 %v997
        %v1007 = vpack.c.b16 %v1004, %v1003
        %v1008 = vpack.c.b16 %v1006, %v1005
        %vm1011 = vcmask 261120
        %v1013 = vsel %vm1011, %v993, 0
        %1015 = vmatpush.bf16.msra.mxu0 0
        %1016 = vmatpush.bf16.msra.mxu0 0
        %1017 = vmatpush.bf16.msra.mxu0 0
        %1018 = vmatpush.bf16.msra.mxu0 0
        %1019 = vmatpush.bf16.msra.mxu0 0
        %1020 = vmatpush.bf16.msra.mxu0 0
        %1021 = vmatpush.bf16.msra.mxu0 %v1008
        %1022 = vmatpush.bf16.msra.mxu0 %v1007
        %1023 = vmatmul.bf16.gmra.mxu0 %v1013
        %v1024 = vpop.f32.mrf.mxu0
        %v1025 = vadd.f32 %v998, %v1024
        %v1026 = vpop.f32.mrf.mxu0
        %v1027 = vadd.f32 %v998, %v1026
        %1028 = vdwg.mxu0
        %v1029 = vadd.f32 %v952, %v1025
        %v1030 = vadd.f32 %v953, %v1027
        %v1031 = vsel %vm657, %v1029, 0.0
        %1032 = vadd.xlane.f32.xlu0 %v1031
        %v1033 = vpop.xlane.xlu0 %1032
        %v1034 = vsel %vm657, %v1030, 0.0
        %1035 = vadd.xlane.f32.xlu0 %v1034
        %v1036 = vpop.xlane.xlu0 %1035
        %v1037 = vmul.f32 %v1033, %v909
        %v1038 = vmul.f32 %v1036, %v909
        %v1039 = vsub.f32 %v1029, %v1037
        %v1040 = vsub.f32 %v1030, %v1038
        %v1041 = vmul.f32 %v1039, %v1039
        %v1042 = vmul.f32 %v1040, %v1040
        %v1043 = vsel %vm657, %v1041, 0.0
        %1044 = vadd.xlane.f32.xlu0 %v1043
        %v1045 = vpop.xlane.xlu0 %1044
        %v1046 = vsel %vm657, %v1042, 0.0
        %1047 = vadd.xlane.f32.xlu0 %v1046
        %v1048 = vpop.xlane.xlu0 %1047
        %v1049 = vmul.f32 %v1045, %v909
        %v1050 = vmul.f32 %v1048, %v909
        %v1051 = vadd.f32 %v1049, 1e-05
        %v1052 = vadd.f32 %v1050, 1e-05
        %v1053 = vrsqrt.pop %v1051
        %v1054 = vmul.f32 %v1053, %v1051
        %v1055 = vmul.f32 %v1054, %v1053
        %v1056 = vmul.f32 0.5, %v1055
        %v1057 = vsub.f32 1.5, %v1056
        %v1058 = vmul.f32 %v1053, %v1057
        %vm1059 = vweird.f32 %v1051
        %vm1060 = vweird.f32 %v1053
        %vm1061 = vmor %vm1059, %vm1060
        %v1062 = vsel %vm1061, %v1053, %v1058
        %v1063 = vrsqrt.pop %v1052
        %v1064 = vmul.f32 %v1063, %v1052
        %v1065 = vmul.f32 %v1064, %v1063
        %v1066 = vmul.f32 0.5, %v1065
        %v1067 = vsub.f32 1.5, %v1066
        %v1068 = vmul.f32 %v1063, %v1067
        %vm1069 = vweird.f32 %v1052
        %vm1070 = vweird.f32 %v1063
        %vm1071 = vmor %vm1069, %vm1070
        %v1072 = vsel %vm1071, %v1063, %v1068
        %v1073 = vmul.f32 %v1039, %v1062
        %v1074 = vmul.f32 %v1040, %v1072
        %v1075 = vperm.slane %v615, 4
        %v1076 = vmul.f32 %v1073, %v1075
        %v1077 = vmul.f32 %v1074, %v1075
        %v1078 = vperm.slane %v615, 5
        %v1079 = vadd.f32 %v1076, %v1078
        %v1080 = vadd.f32 %v1077, %v1078
        %1081 = vst.msk [vmem:[#allocation2] sm:$0xff] %vm657, %v1079
        %1082 = vst.msk [vmem:[#allocation2 + $0x8] sm:$0xff] %vm657, %v1080
        %s1083 = sand.u32 %s335, 1
        %s1084 = scalar_lea.sflag [#allocation5], %s1083
        %s1085 = sand.u32 %s335, 1
        %s1086 = smul.addr %s1085, 8
        %s1087 = scalar_lea.vmem [#allocation4], %s1086
        // Predicated region
        $region65: #{tpu_custom_call.1} parent=59 // pred_check
          %p1088 = pneg %p317
        $region66: #{tpu_custom_call.1} parent=59 // pred_check_branch
          %1090 = sbr.rel (%p1088) target = $region68
        $region67: #{tpu_custom_call.1} parent=59 // pred_region
          %s1091 = smul.u32 2, %s31
          %1093 = vsyncadd [#allocation3], 0
          %s1094 = smul.addr %s1091, 8
          %s1095 = scalar_lea.hbm %s10, %s1094
          %s1096 = sshll.u32 [#allocation2], 4
          %s1097 = int_to_ptr.vmem [resolvable:$true] %s1096
          %s1098 = sshll.u32 %s1095, 4
          %s1099 = int_to_ptr.hbm [resolvable:$true] %s1098
          %1104 = dma.vmem_to_hbm [thread:$0]  %s1097, 256, %s1099, [#allocation3], 128, 128, 8
        $region68: #{tpu_custom_call.1} parent=59 // pred_fallthru
          _
        // Predicated region
        $region69: #{tpu_custom_call.1} parent=59 // pred_check
          %p1105 = pneg %p345
        $region70: #{tpu_custom_call.1} parent=59 // pred_check_branch
          %1107 = sbr.rel (%p1105) target = $region72
        $region71: #{tpu_custom_call.1} parent=59 // pred_region
          %s1108 = smul.u32 2, %s31
          %1110 = vsyncadd %s1084, 0
          %s1111 = smul.addr %s32, 2
          %s1112 = sadd.s32 %s1108, %s1111
          %s1113 = smul.addr %s1112, 4
          %s1114 = scalar_lea.hbm %s11, %s1113
          %s1115 = sshll.u32 %s1087, 4
          %s1116 = int_to_ptr.vmem [resolvable:$true] %s1115
          %s1117 = sshll.u32 %s1114, 4
          %s1118 = int_to_ptr.hbm [resolvable:$true] %s1117
          %1123 = dma.vmem_to_hbm [thread:$0]  %s1116, 128, %s1118, %s1084, 64, 64, 4
        $region72: #{tpu_custom_call.1} parent=59 // pred_fallthru
          _
        // Predicated region
        $region73: #{tpu_custom_call.1} parent=59 // pred_check
          %p1124 = pneg %p317
        $region74: #{tpu_custom_call.1} parent=59 // pred_check_branch
          %1126 = sbr.rel (%p1124) target = $region76
        $region75: #{tpu_custom_call.1} parent=59 // pred_region
          %1128 = dma.done [#allocation3], 256
        $region76: #{tpu_custom_call.1} parent=59 // pred_fallthru
          _
      $region60: #{tpu_custom_call.1} parent=5 // pred_fallthru
        _
      %p1129 = scmp.le.s32.totalorder 2, %s22
      // Predicated region
      $region77: #{tpu_custom_call.1} parent=5 // pred_check
        %p1130 = pneg %p1129
      $region78: #{tpu_custom_call.1} parent=5 // pred_check_branch
        %1132 = sbr.rel (%p1130) target = $region80
      $region79: #{tpu_custom_call.1} parent=5 // pred_region
        %s1133 = ssub.s32 %s22, 2
        // Predicated region
        $region81: #{tpu_custom_call.1} parent=79 // pred_check
          %p1134 = pneg %p351
        $region82: #{tpu_custom_call.1} parent=79 // pred_check_branch
          %1136 = sbr.rel (%p1134) target = $region84
        $region83: #{tpu_custom_call.1} parent=79 // pred_region
          %s1137 = sand.u32 %s336, 1
          %s1138 = scalar_lea.sflag [#allocation5], %s1137
          %s1139 = sand.u32 %s336, 1
          %s1140 = smul.addr %s1139, 8
          %s1141 = scalar_lea.vmem [#allocation4], %s1140
          %1143 = dma.done %s1138, 128
        $region84: #{tpu_custom_call.1} parent=79 // pred_fallthru
          _
      $region80: #{tpu_custom_call.1} parent=5 // pred_fallthru
        _
    $region6: #{tpu_custom_call.1} parent=1 // loop_footer
      %s26 = sadd.s32 1, %s22
    $region7: #{tpu_custom_call.1} parent=1 // loop_footer_branch
      %21 = sbr.rel target = $region3
    $region8: #{tpu_custom_call.1} parent=1 // loop_exit
      _
    %1144 = vsyncpa [#allocation3], 1
    %s1145 = scalar_lea.sflag [#allocation3], 1
    %1146 = vsyncpa %s1145, 1
    %1147 = vsyncpa [#allocation5], 1
    %s1148 = scalar_lea.sflag [#allocation5], 1
    %1149 = vsyncpa %s1148, 1

</llo_original>
